<compile_context>
chip_gen: v6e
topology: v6e:2x2x1
jax: 0.10.0
libtpu: 0.0.40
codegen_flags: <defaults>
</compile_context>

<pallas_src>
import functools

import jax
import jax.numpy as jnp
import numpy as np
from jax.experimental import pallas as pl
from jax.experimental.pallas import tpu as pltpu

SMOOTH = 1.0  # DiceScore(smooth=1)
_FRAC = 126.0 / 255.0  # floor(norm*255) > 125  <=>  norm >= 126/255


# --------------------------------------------------------------------------
# Pass 1: dice partial sums + global min/max of logits and targets.
# --------------------------------------------------------------------------
def _pass1_kernel(logits_ref, targets_ref, out_ref,
                  inter_acc, m1_acc, m2_acc,
                  lmin_acc, lmax_acc, tmin_acc, tmax_acc):
    t = pl.program_id(0)

    @pl.when(t == 0)
    def _init():
        inter_acc[...] = jnp.zeros_like(inter_acc)
        m1_acc[...] = jnp.zeros_like(m1_acc)
        m2_acc[...] = jnp.zeros_like(m2_acc)
        lmin_acc[...] = jnp.full_like(lmin_acc, jnp.inf)
        lmax_acc[...] = jnp.full_like(lmax_acc, -jnp.inf)
        tmin_acc[...] = jnp.full_like(tmin_acc, jnp.inf)
        tmax_acc[...] = jnp.full_like(tmax_acc, -jnp.inf)

    x = logits_ref[...].astype(jnp.float32)   # (N, TILE_F)
    y = targets_ref[...].astype(jnp.float32)  # (N, TILE_F)

    # sigmoid(x) > 0.5  <=>  x > 0  (no per-element sigmoid needed)
    m1 = (x > 0.0).astype(jnp.float32)
    m2 = (y > 0.5).astype(jnp.float32)

    inter_acc[...] += jnp.sum(m1 * m2, axis=1, keepdims=True)
    m1_acc[...] += jnp.sum(m1, axis=1, keepdims=True)
    m2_acc[...] += jnp.sum(m2, axis=1, keepdims=True)

    lmin_acc[...] = jnp.minimum(lmin_acc[...],
                                jnp.min(x, axis=(0, 1), keepdims=True))
    lmax_acc[...] = jnp.maximum(lmax_acc[...],
                                jnp.max(x, axis=(0, 1), keepdims=True))
    tmin_acc[...] = jnp.minimum(tmin_acc[...],
                                jnp.min(y, axis=(0, 1), keepdims=True))
    tmax_acc[...] = jnp.maximum(tmax_acc[...],
                                jnp.max(y, axis=(0, 1), keepdims=True))

    @pl.when(t == pl.num_programs(0) - 1)
    def _finalize():
        n = inter_acc.shape[0]
        per_sample = (2.0 * (inter_acc[...] + SMOOTH)
                      / (m1_acc[...] + m2_acc[...] + SMOOTH))          # (N, 1)
        score = jnp.sum(per_sample, axis=(0, 1), keepdims=True) / n    # (1, 1)
        out_ref[...] = jnp.zeros_like(out_ref)
        out_ref[:, 0:1] = score
        out_ref[:, 1:2] = lmin_acc[...]
        out_ref[:, 2:3] = lmax_acc[...]
        out_ref[:, 3:4] = tmin_acc[...]
        out_ref[:, 4:5] = tmax_acc[...]


# --------------------------------------------------------------------------
# Pass 2: confusion counts via scalar thresholds (3 reductions total).
# --------------------------------------------------------------------------
def _pass2_kernel(thr_ref, logits_ref, targets_ref, out_ref,
                  tp_acc, pred_acc, gt_acc, *, total_elems):
    t = pl.program_id(0)

    @pl.when(t == 0)
    def _init():
        tp_acc[...] = jnp.zeros_like(tp_acc)
        pred_acc[...] = jnp.zeros_like(pred_acc)
        gt_acc[...] = jnp.zeros_like(gt_acc)

    x = logits_ref[...].astype(jnp.float32)
    y = targets_ref[...].astype(jnp.float32)

    l_thr = thr_ref[0]  # logit-space threshold for predictions (SMEM scalar)
    t_thr = thr_ref[1]  # value-space threshold for ground truth

    pred = (x >= l_thr).astype(jnp.float32)
    gt = (y >= t_thr).astype(jnp.float32)

    tp_acc[...] += jnp.sum(pred * gt, axis=(0, 1), keepdims=True)
    pred_acc[...] += jnp.sum(pred, axis=(0, 1), keepdims=True)
    gt_acc[...] += jnp.sum(gt, axis=(0, 1), keepdims=True)

    @pl.when(t == pl.num_programs(0) - 1)
    def _finalize():
        tp = tp_acc[...]
        sp = pred_acc[...]
        sg = gt_acc[...]
        fp = sp - tp
        fn = sg - tp
        tn = total_elems - sp - sg + tp
        out_ref[...] = jnp.zeros_like(out_ref)
        out_ref[:, 0:1] = tp / (tp + fn)                       # SENS
        out_ref[:, 1:2] = tn / (tn + fp)                       # SPEC
        out_ref[:, 2:3] = fp / (tn + fn)                       # EF
        out_ref[:, 3:4] = tp / (tp + fn + fp)                  # IOU
        out_ref[:, 4:5] = 2.0 * tp / (2.0 * tp + fp + fn)      # DSC
        out_ref[:, 5:6] = tp / (tp + fp)                       # PPV
        out_ref[:, 6:7] = tn / (tn + fn)                       # NPV


def _pick_tile_f(f, max_tile):
    """Largest multiple of 128 <= max_tile that divides F (else full F)."""
    if f % 128 != 0 or f <= max_tile:
        return f
    for cand in range(max_tile - (max_tile % 128), 127, -128):
        if f % cand == 0:
            return cand
    return f  # fallback: single tile (no padding implemented for odd F)


@functools.partial(jax.jit, static_argnames=("max_tile_f",))
def dice_score(logits, targets, max_tile_f=4096):
    """logits, targets: (N, C, H, W). Returns the 8 scalars of DiceScore."""
    n = logits.shape[0]
    f = int(np.prod(logits.shape[1:]))
    logits2d = logits.reshape(n, f)       # no dtype upcast in the wrapper
    targets2d = targets.reshape(n, f)

    tile_f = _pick_tile_f(f, max_tile_f)
    num_tiles = f // tile_f
    grid = (num_tiles,)
    cparams = pltpu.CompilerParams(dimension_semantics=("arbitrary",))

    data_spec = pl.BlockSpec((n, tile_f), lambda t: (0, t))
    stat_spec = pl.BlockSpec((1, 8), lambda t: (0, 0))

    # ---------------- pass 1: dice sums + global min/max ----------------
    stats = pl.pallas_call(
        _pass1_kernel,
        out_shape=jax.ShapeDtypeStruct((1, 8), jnp.float32),
        grid=grid,
        in_specs=[data_spec, data_spec],
        out_specs=stat_spec,
        scratch_shapes=[
            pltpu.VMEM((n, 1), jnp.float32),  # inter
            pltpu.VMEM((n, 1), jnp.float32),  # m1 sum
            pltpu.VMEM((n, 1), jnp.float32),  # m2 sum
            pltpu.VMEM((1, 1), jnp.float32),  # logits min
            pltpu.VMEM((1, 1), jnp.float32),  # logits max
            pltpu.VMEM((1, 1), jnp.float32),  # targets min
            pltpu.VMEM((1, 1), jnp.float32),  # targets max
        ],
        compiler_params=cparams,
    )(logits2d, targets2d)

    score = stats[0, 0]
    l_min, l_max = stats[0, 1], stats[0, 2]
    t_min, t_max = stats[0, 3], stats[0, 4]

    # Scalar threshold derivation (a handful of scalar ops):
    #   pred <=> sigmoid(x) >= p_min + 126/255*(p_max - p_min)
    #        <=> x >= logit(p_thr)            (sigmoid is monotone)
    frac = jnp.float32(_FRAC)
    p_min = jax.nn.sigmoid(l_min)
    p_max = jax.nn.sigmoid(l_max)
    p_thr = p_min + frac * (p_max - p_min)
    l_thr = jnp.log(p_thr) - jnp.log1p(-p_thr)
    t_thr = t_min + frac * (t_max - t_min)
    thr = jnp.stack([l_thr, t_thr]).astype(jnp.float32)  # (2,) -> SMEM

    # ---------------- pass 2: confusion matrix + ratios ----------------
    metrics = pl.pallas_call(
        functools.partial(_pass2_kernel, total_elems=float(n) * float(f)),
        out_shape=jax.ShapeDtypeStruct((1, 8), jnp.float32),
        grid=grid,
        in_specs=[pl.BlockSpec(memory_space=pltpu.MemorySpace.SMEM),
                  data_spec, data_spec],
        out_specs=stat_spec,
        scratch_shapes=[
            pltpu.VMEM((1, 1), jnp.float32),  # tp
            pltpu.VMEM((1, 1), jnp.float32),  # sum(pred)
            pltpu.VMEM((1, 1), jnp.float32),  # sum(gt)
        ],
        compiler_params=cparams,
    )(thr, logits2d, targets2d)

    return (score,
            metrics[0, 0], metrics[0, 1], metrics[0, 2], metrics[0, 3],
            metrics[0, 4], metrics[0, 5], metrics[0, 6])


# --------------------------------------------------------------------------
# Pure numpy reference mirroring the PyTorch module.
# --------------------------------------------------------------------------
def _reference(logits, targets, smooth=1.0):
    logits = np.asarray(logits, np.float32)
    targets = np.asarray(targets, np.float32)
    num = logits.shape[0]
    probs = 1.0 / (1.0 + np.exp(-logits))
    m1 = probs.reshape(num, -1) > 0.5
    m2 = targets.reshape(num, -1) > 0.5
    inter = (m1 * m2).sum(1)
    score = (2.0 * (inter + smooth) / (m1.sum(1) + m2.sum(1) + smooth)).sum() / num

    def norm_thresh(v):
        vn = (v - v.min()) / (v.max() - v.min())
        return np.where((vn * 255).astype('int') > 125, 1, 0)

    p = norm_thresh(probs)
    g = norm_thresh(targets)
    tp = np.sum((p == 1) & (g == 1))
    tn = np.sum((p == 0) & (g == 0))
    fp = np.sum((p == 1) & (g == 0))
    fn = np.sum((p == 0) & (g == 1))
    return (score, tp / (tp + fn), tn / (tn + fp), fp / (tn + fn),
            tp / (tp + fn + fp), 2 * tp / (2 * tp + fp + fn),
            tp / (tp + fp), tn / (tn + fn))


if __name__ == "__main__":
    key = jax.random.PRNGKey(0)
    k1, k2 = jax.random.split(key)
    N, C, H, W = 2, 4, 16, 16
    logits = jax.random.normal(k1, (N, C, H, W), dtype=jnp.float32)
    targets = (jax.random.uniform(k2, (N, C, H, W)) > 0.5).astype(jnp.float32)

    # max_tile_f=512 -> F=1024 streams as 2 grid steps, exercising the
    # tiled accumulation path (production default is 4096).
    out = dice_score(logits, targets, max_tile_f=512)
    out = jax.block_until_ready(out)

    ref = _reference(np.asarray(logits), np.asarray(targets), SMOOTH)
    for got, exp in zip(out, ref):
        np.testing.assert_allclose(np.asarray(got), np.float32(exp),
                                   rtol=1e-5, atol=1e-5)

    print("KERNEL_OK")
</pallas_src>

<mosaic_0001>
module attributes {stable_mosaic.version = 11 : i64} {
  func.func @_pass1_kernel(%arg0: i32, %arg1: memref<2x512xf32, #tpu.memory_space<vmem>>, %arg2: memref<2x512xf32, #tpu.memory_space<vmem>>, %arg3: memref<1x8xf32, #tpu.memory_space<vmem>>, %arg4: memref<2x1xf32, #tpu.memory_space<vmem>>, %arg5: memref<2x1xf32, #tpu.memory_space<vmem>>, %arg6: memref<2x1xf32, #tpu.memory_space<vmem>>, %arg7: memref<1x1xf32, #tpu.memory_space<vmem>>, %arg8: memref<1x1xf32, #tpu.memory_space<vmem>>, %arg9: memref<1x1xf32, #tpu.memory_space<vmem>>, %arg10: memref<1x1xf32, #tpu.memory_space<vmem>>) attributes {dimension_semantics = [#tpu.dimension_semantics<arbitrary>], iteration_bounds = array<i64: 2>, scalar_prefetch = 0 : i64, scratch_operands = 7 : i64, tpu.core_type = #tpu.core_type<tc>, window_params = [{transform_indices = @transform_0, window_bounds = array<i64: 2, 512>}, {transform_indices = @transform_1, window_bounds = array<i64: 2, 512>}, {pipeline_mode = #tpu.pipeline_mode<synchronous>, transform_indices = @transform_2, window_bounds = array<i64: 1, 8>}]} {
    %c0_i32 = arith.constant 0 : i32
    %0 = arith.cmpi eq, %arg0, %c0_i32 : i32
    %1 = arith.extui %0 : i1 to i32
    %c0_i32_0 = arith.constant 0 : i32
    %2 = arith.cmpi ne, %1, %c0_i32_0 : i32
    scf.if %2 {
      %cst_41 = arith.constant 0.000000e+00 : f32
      %64 = vector.broadcast %cst_41 : f32 to vector<2x1xf32>
      %c0_42 = arith.constant 0 : index
      %c0_43 = arith.constant 0 : index
      %65 = vector.load %arg4[%c0_42, %c0_43] : memref<2x1xf32, #tpu.memory_space<vmem>>, vector<2x1xf32>
      tpu.vector_store %arg4[%c0_42, %c0_43], %64 {strides = array<i32>} : memref<2x1xf32, #tpu.memory_space<vmem>>, vector<2x1xf32>,
      %cst_44 = arith.constant 0.000000e+00 : f32
      %66 = vector.broadcast %cst_44 : f32 to vector<2x1xf32>
      %c0_45 = arith.constant 0 : index
      %c0_46 = arith.constant 0 : index
      %67 = vector.load %arg5[%c0_45, %c0_46] : memref<2x1xf32, #tpu.memory_space<vmem>>, vector<2x1xf32>
      tpu.vector_store %arg5[%c0_45, %c0_46], %66 {strides = array<i32>} : memref<2x1xf32, #tpu.memory_space<vmem>>, vector<2x1xf32>,
      %cst_47 = arith.constant 0.000000e+00 : f32
      %68 = vector.broadcast %cst_47 : f32 to vector<2x1xf32>
      %c0_48 = arith.constant 0 : index
      %c0_49 = arith.constant 0 : index
      %69 = vector.load %arg6[%c0_48, %c0_49] : memref<2x1xf32, #tpu.memory_space<vmem>>, vector<2x1xf32>
      tpu.vector_store %arg6[%c0_48, %c0_49], %68 {strides = array<i32>} : memref<2x1xf32, #tpu.memory_space<vmem>>, vector<2x1xf32>,
      %cst_50 = arith.constant 0x7F800000 : f32
      %70 = vector.broadcast %cst_50 : f32 to vector<1x1xf32>
      %c0_51 = arith.constant 0 : index
      %c0_52 = arith.constant 0 : index
      %71 = vector.load %arg7[%c0_51, %c0_52] : memref<1x1xf32, #tpu.memory_space<vmem>>, vector<1x1xf32>
      tpu.vector_store %arg7[%c0_51, %c0_52], %70 {strides = array<i32>} : memref<1x1xf32, #tpu.memory_space<vmem>>, vector<1x1xf32>,
      %cst_53 = arith.constant 0xFF800000 : f32
      %72 = vector.broadcast %cst_53 : f32 to vector<1x1xf32>
      %c0_54 = arith.constant 0 : index
      %c0_55 = arith.constant 0 : index
      %73 = vector.load %arg8[%c0_54, %c0_55] : memref<1x1xf32, #tpu.memory_space<vmem>>, vector<1x1xf32>
      tpu.vector_store %arg8[%c0_54, %c0_55], %72 {strides = array<i32>} : memref<1x1xf32, #tpu.memory_space<vmem>>, vector<1x1xf32>,
      %cst_56 = arith.constant 0x7F800000 : f32
      %74 = vector.broadcast %cst_56 : f32 to vector<1x1xf32>
      %c0_57 = arith.constant 0 : index
      %c0_58 = arith.constant 0 : index
      %75 = vector.load %arg9[%c0_57, %c0_58] : memref<1x1xf32, #tpu.memory_space<vmem>>, vector<1x1xf32>
      tpu.vector_store %arg9[%c0_57, %c0_58], %74 {strides = array<i32>} : memref<1x1xf32, #tpu.memory_space<vmem>>, vector<1x1xf32>,
      %cst_59 = arith.constant 0xFF800000 : f32
      %76 = vector.broadcast %cst_59 : f32 to vector<1x1xf32>
      %c0_60 = arith.constant 0 : index
      %c0_61 = arith.constant 0 : index
      %77 = vector.load %arg10[%c0_60, %c0_61] : memref<1x1xf32, #tpu.memory_space<vmem>>, vector<1x1xf32>
      tpu.vector_store %arg10[%c0_60, %c0_61], %76 {strides = array<i32>} : memref<1x1xf32, #tpu.memory_space<vmem>>, vector<1x1xf32>,
    } else {
    }
    %c0 = arith.constant 0 : index
    %c0_1 = arith.constant 0 : index
    %3 = vector.load %arg1[%c0, %c0_1] : memref<2x512xf32, #tpu.memory_space<vmem>>, vector<2x512xf32>
    %c0_2 = arith.constant 0 : index
    %c0_3 = arith.constant 0 : index
    %4 = vector.load %arg2[%c0_2, %c0_3] : memref<2x512xf32, #tpu.memory_space<vmem>>, vector<2x512xf32>
    %cst = arith.constant 0.000000e+00 : f32
    %5 = vector.broadcast %cst : f32 to vector<2x512xf32>
    %6 = arith.cmpf ogt, %3, %5 : vector<2x512xf32>
    %7 = arith.extui %6 : vector<2x512xi1> to vector<2x512xi32>
    %8 = arith.sitofp %7 : vector<2x512xi32> to vector<2x512xf32>
    %cst_4 = arith.constant 5.000000e-01 : f32
    %9 = vector.broadcast %cst_4 : f32 to vector<2x512xf32>
    %10 = arith.cmpf ogt, %4, %9 : vector<2x512xf32>
    %11 = arith.extui %10 : vector<2x512xi1> to vector<2x512xi32>
    %12 = arith.sitofp %11 : vector<2x512xi32> to vector<2x512xf32>
    %c0_5 = arith.constant 0 : index
    %c0_6 = arith.constant 0 : index
    %13 = vector.load %arg4[%c0_5, %c0_6] : memref<2x1xf32, #tpu.memory_space<vmem>>, vector<2x1xf32>
    %14 = arith.mulf %8, %12 : vector<2x512xf32>
    %cst_7 = arith.constant dense<0.000000e+00> : vector<2xf32>
    %15 = vector.multi_reduction <add>, %14, %cst_7 [1] : vector<2x512xf32> to vector<2xf32>
    %16 = vector.shape_cast %15 : vector<2xf32> to vector<2x1xf32>
    %17 = arith.addf %13, %16 : vector<2x1xf32>
    %c0_8 = arith.constant 0 : index
    %c0_9 = arith.constant 0 : index
    %18 = vector.load %arg4[%c0_8, %c0_9] : memref<2x1xf32, #tpu.memory_space<vmem>>, vector<2x1xf32>
    tpu.vector_store %arg4[%c0_8, %c0_9], %17 {strides = array<i32>} : memref<2x1xf32, #tpu.memory_space<vmem>>, vector<2x1xf32>,
    %c0_10 = arith.constant 0 : index
    %c0_11 = arith.constant 0 : index
    %19 = vector.load %arg5[%c0_10, %c0_11] : memref<2x1xf32, #tpu.memory_space<vmem>>, vector<2x1xf32>
    %cst_12 = arith.constant dense<0.000000e+00> : vector<2xf32>
    %20 = vector.multi_reduction <add>, %8, %cst_12 [1] : vector<2x512xf32> to vector<2xf32>
    %21 = vector.shape_cast %20 : vector<2xf32> to vector<2x1xf32>
    %22 = arith.addf %19, %21 : vector<2x1xf32>
    %c0_13 = arith.constant 0 : index
    %c0_14 = arith.constant 0 : index
    %23 = vector.load %arg5[%c0_13, %c0_14] : memref<2x1xf32, #tpu.memory_space<vmem>>, vector<2x1xf32>
    tpu.vector_store %arg5[%c0_13, %c0_14], %22 {strides = array<i32>} : memref<2x1xf32, #tpu.memory_space<vmem>>, vector<2x1xf32>,
    %c0_15 = arith.constant 0 : index
    %c0_16 = arith.constant 0 : index
    %24 = vector.load %arg6[%c0_15, %c0_16] : memref<2x1xf32, #tpu.memory_space<vmem>>, vector<2x1xf32>
    %cst_17 = arith.constant dense<0.000000e+00> : vector<2xf32>
    %25 = vector.multi_reduction <add>, %12, %cst_17 [1] : vector<2x512xf32> to vector<2xf32>
    %26 = vector.shape_cast %25 : vector<2xf32> to vector<2x1xf32>
    %27 = arith.addf %24, %26 : vector<2x1xf32>
    %c0_18 = arith.constant 0 : index
    %c0_19 = arith.constant 0 : index
    %28 = vector.load %arg6[%c0_18, %c0_19] : memref<2x1xf32, #tpu.memory_space<vmem>>, vector<2x1xf32>
    tpu.vector_store %arg6[%c0_18, %c0_19], %27 {strides = array<i32>} : memref<2x1xf32, #tpu.memory_space<vmem>>, vector<2x1xf32>,
    %c0_20 = arith.constant 0 : index
    %c0_21 = arith.constant 0 : index
    %29 = vector.load %arg7[%c0_20, %c0_21] : memref<1x1xf32, #tpu.memory_space<vmem>>, vector<1x1xf32>
    %30 = vector.shape_cast %3 : vector<2x512xf32> to vector<1x2x512xf32>
    %cst_22 = arith.constant dense<0x7F800000> : vector<1xf32>
    %31 = vector.multi_reduction <minimumf>, %30, %cst_22 [1, 2] : vector<1x2x512xf32> to vector<1xf32>
    %32 = vector.shape_cast %31 : vector<1xf32> to vector<1x1x1xf32>
    %33 = vector.extract %32[0, 0, 0] : f32 from vector<1x1x1xf32>
    %34 = vector.broadcast %33 : f32 to vector<1x1xf32>
    %35 = arith.minimumf %29, %34 : vector<1x1xf32>
    %c0_23 = arith.constant 0 : index
    %c0_24 = arith.constant 0 : index
    %36 = vector.load %arg7[%c0_23, %c0_24] : memref<1x1xf32, #tpu.memory_space<vmem>>, vector<1x1xf32>
    tpu.vector_store %arg7[%c0_23, %c0_24], %35 {strides = array<i32>} : memref<1x1xf32, #tpu.memory_space<vmem>>, vector<1x1xf32>,
    %c0_25 = arith.constant 0 : index
    %c0_26 = arith.constant 0 : index
    %37 = vector.load %arg8[%c0_25, %c0_26] : memref<1x1xf32, #tpu.memory_space<vmem>>, vector<1x1xf32>
    %38 = vector.shape_cast %3 : vector<2x512xf32> to vector<1x2x512xf32>
    %cst_27 = arith.constant dense<0xFF800000> : vector<1xf32>
    %39 = vector.multi_reduction <maximumf>, %38, %cst_27 [1, 2] : vector<1x2x512xf32> to vector<1xf32>
    %40 = vector.shape_cast %39 : vector<1xf32> to vector<1x1x1xf32>
    %41 = vector.extract %40[0, 0, 0] : f32 from vector<1x1x1xf32>
    %42 = vector.broadcast %41 : f32 to vector<1x1xf32>
    %43 = arith.maximumf %37, %42 : vector<1x1xf32>
    %c0_28 = arith.constant 0 : index
    %c0_29 = arith.constant 0 : index
    %44 = vector.load %arg8[%c0_28, %c0_29] : memref<1x1xf32, #tpu.memory_space<vmem>>, vector<1x1xf32>
    tpu.vector_store %arg8[%c0_28, %c0_29], %43 {strides = array<i32>} : memref<1x1xf32, #tpu.memory_space<vmem>>, vector<1x1xf32>,
    %c0_30 = arith.constant 0 : index
    %c0_31 = arith.constant 0 : index
    %45 = vector.load %arg9[%c0_30, %c0_31] : memref<1x1xf32, #tpu.memory_space<vmem>>, vector<1x1xf32>
    %46 = vector.shape_cast %4 : vector<2x512xf32> to vector<1x2x512xf32>
    %cst_32 = arith.constant dense<0x7F800000> : vector<1xf32>
    %47 = vector.multi_reduction <minimumf>, %46, %cst_32 [1, 2] : vector<1x2x512xf32> to vector<1xf32>
    %48 = vector.shape_cast %47 : vector<1xf32> to vector<1x1x1xf32>
    %49 = vector.extract %48[0, 0, 0] : f32 from vector<1x1x1xf32>
    %50 = vector.broadcast %49 : f32 to vector<1x1xf32>
    %51 = arith.minimumf %45, %50 : vector<1x1xf32>
    %c0_33 = arith.constant 0 : index
    %c0_34 = arith.constant 0 : index
    %52 = vector.load %arg9[%c0_33, %c0_34] : memref<1x1xf32, #tpu.memory_space<vmem>>, vector<1x1xf32>
    tpu.vector_store %arg9[%c0_33, %c0_34], %51 {strides = array<i32>} : memref<1x1xf32, #tpu.memory_space<vmem>>, vector<1x1xf32>,
    %c0_35 = arith.constant 0 : index
    %c0_36 = arith.constant 0 : index
    %53 = vector.load %arg10[%c0_35, %c0_36] : memref<1x1xf32, #tpu.memory_space<vmem>>, vector<1x1xf32>
    %54 = vector.shape_cast %4 : vector<2x512xf32> to vector<1x2x512xf32>
    %cst_37 = arith.constant dense<0xFF800000> : vector<1xf32>
    %55 = vector.multi_reduction <maximumf>, %54, %cst_37 [1, 2] : vector<1x2x512xf32> to vector<1xf32>
    %56 = vector.shape_cast %55 : vector<1xf32> to vector<1x1x1xf32>
    %57 = vector.extract %56[0, 0, 0] : f32 from vector<1x1x1xf32>
    %58 = vector.broadcast %57 : f32 to vector<1x1xf32>
    %59 = arith.maximumf %53, %58 : vector<1x1xf32>
    %c0_38 = arith.constant 0 : index
    %c0_39 = arith.constant 0 : index
    %60 = vector.load %arg10[%c0_38, %c0_39] : memref<1x1xf32, #tpu.memory_space<vmem>>, vector<1x1xf32>
    tpu.vector_store %arg10[%c0_38, %c0_39], %59 {strides = array<i32>} : memref<1x1xf32, #tpu.memory_space<vmem>>, vector<1x1xf32>,
    %c1_i32 = arith.constant 1 : i32
    %61 = arith.cmpi eq, %arg0, %c1_i32 : i32
    %62 = arith.extui %61 : i1 to i32
    %c0_i32_40 = arith.constant 0 : i32
    %63 = arith.cmpi ne, %62, %c0_i32_40 : i32
    scf.if %63 {
      %c0_41 = arith.constant 0 : index
      %c0_42 = arith.constant 0 : index
      %64 = vector.load %arg4[%c0_41, %c0_42] : memref<2x1xf32, #tpu.memory_space<vmem>>, vector<2x1xf32>
      %cst_43 = arith.constant 1.000000e+00 : f32
      %65 = vector.broadcast %cst_43 : f32 to vector<2x1xf32>
      %66 = arith.addf %64, %65 : vector<2x1xf32>
      %cst_44 = arith.constant 2.000000e+00 : f32
      %67 = vector.broadcast %cst_44 : f32 to vector<2x1xf32>
      %68 = arith.mulf %67, %66 : vector<2x1xf32>
      %c0_45 = arith.constant 0 : index
      %c0_46 = arith.constant 0 : index
      %69 = vector.load %arg5[%c0_45, %c0_46] : memref<2x1xf32, #tpu.memory_space<vmem>>, vector<2x1xf32>
      %c0_47 = arith.constant 0 : index
      %c0_48 = arith.constant 0 : index
      %70 = vector.load %arg6[%c0_47, %c0_48] : memref<2x1xf32, #tpu.memory_space<vmem>>, vector<2x1xf32>
      %71 = arith.addf %69, %70 : vector<2x1xf32>
      %cst_49 = arith.constant 1.000000e+00 : f32
      %72 = vector.broadcast %cst_49 : f32 to vector<2x1xf32>
      %73 = arith.addf %71, %72 : vector<2x1xf32>
      %74 = arith.divf %68, %73 : vector<2x1xf32>
      %75 = vector.shape_cast %74 : vector<2x1xf32> to vector<1x2x1xf32>
      %cst_50 = arith.constant dense<0.000000e+00> : vector<1xf32>
      %76 = vector.multi_reduction <add>, %75, %cst_50 [1, 2] : vector<1x2x1xf32> to vector<1xf32>
      %77 = vector.shape_cast %76 : vector<1xf32> to vector<1x1x1xf32>
      %78 = vector.extract %77[0, 0, 0] : f32 from vector<1x1x1xf32>
      %79 = vector.broadcast %78 : f32 to vector<1x1xf32>
      %cst_51 = arith.constant 2.000000e+00 : f32
      %80 = vector.broadcast %cst_51 : f32 to vector<1x1xf32>
      %81 = arith.divf %79, %80 : vector<1x1xf32>
      %cst_52 = arith.constant 0.000000e+00 : f32
      %82 = vector.broadcast %cst_52 : f32 to vector<1x8xf32>
      %c0_53 = arith.constant 0 : index
      %c0_54 = arith.constant 0 : index
      %83 = vector.load %arg3[%c0_53, %c0_54] : memref<1x8xf32, #tpu.memory_space<vmem>>, vector<1x8xf32>
      tpu.vector_store %arg3[%c0_53, %c0_54], %82 {strides = array<i32>} : memref<1x8xf32, #tpu.memory_space<vmem>>, vector<1x8xf32>,
      %c0_55 = arith.constant 0 : index
      %c0_56 = arith.constant 0 : index
      %84 = vector.load %arg3[%c0_55, %c0_56] : memref<1x8xf32, #tpu.memory_space<vmem>>, vector<1x1xf32>
      tpu.vector_store %arg3[%c0_55, %c0_56], %81 {strides = array<i32>} : memref<1x8xf32, #tpu.memory_space<vmem>>, vector<1x1xf32>,
      %c0_57 = arith.constant 0 : index
      %c0_58 = arith.constant 0 : index
      %85 = vector.load %arg7[%c0_57, %c0_58] : memref<1x1xf32, #tpu.memory_space<vmem>>, vector<1x1xf32>
      %c0_59 = arith.constant 0 : index
      %c1 = arith.constant 1 : index
      %86 = vector.load %arg3[%c0_59, %c1] : memref<1x8xf32, #tpu.memory_space<vmem>>, vector<1x1xf32>
      tpu.vector_store %arg3[%c0_59, %c1], %85 {strides = array<i32>} : memref<1x8xf32, #tpu.memory_space<vmem>>, vector<1x1xf32>,
      %c0_60 = arith.constant 0 : index
      %c0_61 = arith.constant 0 : index
      %87 = vector.load %arg8[%c0_60, %c0_61] : memref<1x1xf32, #tpu.memory_space<vmem>>, vector<1x1xf32>
      %c0_62 = arith.constant 0 : index
      %c2 = arith.constant 2 : index
      %88 = vector.load %arg3[%c0_62, %c2] : memref<1x8xf32, #tpu.memory_space<vmem>>, vector<1x1xf32>
      tpu.vector_store %arg3[%c0_62, %c2], %87 {strides = array<i32>} : memref<1x8xf32, #tpu.memory_space<vmem>>, vector<1x1xf32>,
      %c0_63 = arith.constant 0 : index
      %c0_64 = arith.constant 0 : index
      %89 = vector.load %arg9[%c0_63, %c0_64] : memref<1x1xf32, #tpu.memory_space<vmem>>, vector<1x1xf32>
      %c0_65 = arith.constant 0 : index
      %c3 = arith.constant 3 : index
      %90 = vector.load %arg3[%c0_65, %c3] : memref<1x8xf32, #tpu.memory_space<vmem>>, vector<1x1xf32>
      tpu.vector_store %arg3[%c0_65, %c3], %89 {strides = array<i32>} : memref<1x8xf32, #tpu.memory_space<vmem>>, vector<1x1xf32>,
      %c0_66 = arith.constant 0 : index
      %c0_67 = arith.constant 0 : index
      %91 = vector.load %arg10[%c0_66, %c0_67] : memref<1x1xf32, #tpu.memory_space<vmem>>, vector<1x1xf32>
      %c0_68 = arith.constant 0 : index
      %c4 = arith.constant 4 : index
      %92 = vector.load %arg3[%c0_68, %c4] : memref<1x8xf32, #tpu.memory_space<vmem>>, vector<1x1xf32>
      tpu.vector_store %arg3[%c0_68, %c4], %91 {strides = array<i32>} : memref<1x8xf32, #tpu.memory_space<vmem>>, vector<1x1xf32>,
    } else {
    }
    return
  }
  func.func @transform_0(%arg0: i32) -> (i32, i32) {
    %c0_i32 = arith.constant 0 : i32
    %c0_i32_0 = arith.constant 0 : i32
    return %c0_i32, %arg0 : i32, i32
  }
  func.func @transform_1(%arg0: i32) -> (i32, i32) {
    %c0_i32 = arith.constant 0 : i32
    %c0_i32_0 = arith.constant 0 : i32
    return %c0_i32, %arg0 : i32, i32
  }
  func.func @transform_2(%arg0: i32) -> (i32, i32) {
    %c0_i32 = arith.constant 0 : i32
    %c0_i32_0 = arith.constant 0 : i32
    %c0_i32_1 = arith.constant 0 : i32
    return %c0_i32, %c0_i32_0 : i32, i32
  }
}

module attributes {stable_mosaic.version = 11 : i64} {
  func.func @_pass2_kernel(%arg0: i32, %arg1: memref<2xf32, #tpu.memory_space<smem>>, %arg2: memref<2x512xf32, #tpu.memory_space<vmem>>, %arg3: memref<2x512xf32, #tpu.memory_space<vmem>>, %arg4: memref<1x8xf32, #tpu.memory_space<vmem>>, %arg5: memref<1x1xf32, #tpu.memory_space<vmem>>, %arg6: memref<1x1xf32, #tpu.memory_space<vmem>>, %arg7: memref<1x1xf32, #tpu.memory_space<vmem>>) attributes {dimension_semantics = [#tpu.dimension_semantics<arbitrary>], iteration_bounds = array<i64: 2>, scalar_prefetch = 0 : i64, scratch_operands = 3 : i64, tpu.core_type = #tpu.core_type<tc>, window_params = [{transform_indices = @transform_0, window_bounds = array<i64: 2>}, {transform_indices = @transform_1, window_bounds = array<i64: 2, 512>}, {transform_indices = @transform_2, window_bounds = array<i64: 2, 512>}, {pipeline_mode = #tpu.pipeline_mode<synchronous>, transform_indices = @transform_3, window_bounds = array<i64: 1, 8>}]} {
    %c0_i32 = arith.constant 0 : i32
    %0 = arith.cmpi eq, %arg0, %c0_i32 : i32
    %1 = arith.extui %0 : i1 to i32
    %c0_i32_0 = arith.constant 0 : i32
    %2 = arith.cmpi ne, %1, %c0_i32_0 : i32
    scf.if %2 {
      %cst_20 = arith.constant 0.000000e+00 : f32
      %43 = vector.broadcast %cst_20 : f32 to vector<1x1xf32>
      %c0_21 = arith.constant 0 : index
      %c0_22 = arith.constant 0 : index
      %44 = vector.load %arg5[%c0_21, %c0_22] : memref<1x1xf32, #tpu.memory_space<vmem>>, vector<1x1xf32>
      tpu.vector_store %arg5[%c0_21, %c0_22], %43 {strides = array<i32>} : memref<1x1xf32, #tpu.memory_space<vmem>>, vector<1x1xf32>,
      %cst_23 = arith.constant 0.000000e+00 : f32
      %45 = vector.broadcast %cst_23 : f32 to vector<1x1xf32>
      %c0_24 = arith.constant 0 : index
      %c0_25 = arith.constant 0 : index
      %46 = vector.load %arg6[%c0_24, %c0_25] : memref<1x1xf32, #tpu.memory_space<vmem>>, vector<1x1xf32>
      tpu.vector_store %arg6[%c0_24, %c0_25], %45 {strides = array<i32>} : memref<1x1xf32, #tpu.memory_space<vmem>>, vector<1x1xf32>,
      %cst_26 = arith.constant 0.000000e+00 : f32
      %47 = vector.broadcast %cst_26 : f32 to vector<1x1xf32>
      %c0_27 = arith.constant 0 : index
      %c0_28 = arith.constant 0 : index
      %48 = vector.load %arg7[%c0_27, %c0_28] : memref<1x1xf32, #tpu.memory_space<vmem>>, vector<1x1xf32>
      tpu.vector_store %arg7[%c0_27, %c0_28], %47 {strides = array<i32>} : memref<1x1xf32, #tpu.memory_space<vmem>>, vector<1x1xf32>,
    } else {
    }
    %c0 = arith.constant 0 : index
    %c0_1 = arith.constant 0 : index
    %3 = vector.load %arg2[%c0, %c0_1] : memref<2x512xf32, #tpu.memory_space<vmem>>, vector<2x512xf32>
    %c0_2 = arith.constant 0 : index
    %c0_3 = arith.constant 0 : index
    %4 = vector.load %arg3[%c0_2, %c0_3] : memref<2x512xf32, #tpu.memory_space<vmem>>, vector<2x512xf32>
    %c0_4 = arith.constant 0 : index
    %5 = memref.load %arg1[%c0_4] : memref<2xf32, #tpu.memory_space<smem>>
    %c1 = arith.constant 1 : index
    %6 = memref.load %arg1[%c1] : memref<2xf32, #tpu.memory_space<smem>>
    %7 = vector.broadcast %5 : f32 to vector<2x512xf32>
    %8 = arith.cmpf oge, %3, %7 : vector<2x512xf32>
    %9 = arith.extui %8 : vector<2x512xi1> to vector<2x512xi32>
    %10 = arith.sitofp %9 : vector<2x512xi32> to vector<2x512xf32>
    %11 = vector.broadcast %6 : f32 to vector<2x512xf32>
    %12 = arith.cmpf oge, %4, %11 : vector<2x512xf32>
    %13 = arith.extui %12 : vector<2x512xi1> to vector<2x512xi32>
    %14 = arith.sitofp %13 : vector<2x512xi32> to vector<2x512xf32>
    %c0_5 = arith.constant 0 : index
    %c0_6 = arith.constant 0 : index
    %15 = vector.load %arg5[%c0_5, %c0_6] : memref<1x1xf32, #tpu.memory_space<vmem>>, vector<1x1xf32>
    %16 = arith.mulf %10, %14 : vector<2x512xf32>
    %17 = vector.shape_cast %16 : vector<2x512xf32> to vector<1x2x512xf32>
    %cst = arith.constant dense<0.000000e+00> : vector<1xf32>
    %18 = vector.multi_reduction <add>, %17, %cst [1, 2] : vector<1x2x512xf32> to vector<1xf32>
    %19 = vector.shape_cast %18 : vector<1xf32> to vector<1x1x1xf32>
    %20 = vector.extract %19[0, 0, 0] : f32 from vector<1x1x1xf32>
    %21 = vector.broadcast %20 : f32 to vector<1x1xf32>
    %22 = arith.addf %15, %21 : vector<1x1xf32>
    %c0_7 = arith.constant 0 : index
    %c0_8 = arith.constant 0 : index
    %23 = vector.load %arg5[%c0_7, %c0_8] : memref<1x1xf32, #tpu.memory_space<vmem>>, vector<1x1xf32>
    tpu.vector_store %arg5[%c0_7, %c0_8], %22 {strides = array<i32>} : memref<1x1xf32, #tpu.memory_space<vmem>>, vector<1x1xf32>,
    %c0_9 = arith.constant 0 : index
    %c0_10 = arith.constant 0 : index
    %24 = vector.load %arg6[%c0_9, %c0_10] : memref<1x1xf32, #tpu.memory_space<vmem>>, vector<1x1xf32>
    %25 = vector.shape_cast %10 : vector<2x512xf32> to vector<1x2x512xf32>
    %cst_11 = arith.constant dense<0.000000e+00> : vector<1xf32>
    %26 = vector.multi_reduction <add>, %25, %cst_11 [1, 2] : vector<1x2x512xf32> to vector<1xf32>
    %27 = vector.shape_cast %26 : vector<1xf32> to vector<1x1x1xf32>
    %28 = vector.extract %27[0, 0, 0] : f32 from vector<1x1x1xf32>
    %29 = vector.broadcast %28 : f32 to vector<1x1xf32>
    %30 = arith.addf %24, %29 : vector<1x1xf32>
    %c0_12 = arith.constant 0 : index
    %c0_13 = arith.constant 0 : index
    %31 = vector.load %arg6[%c0_12, %c0_13] : memref<1x1xf32, #tpu.memory_space<vmem>>, vector<1x1xf32>
    tpu.vector_store %arg6[%c0_12, %c0_13], %30 {strides = array<i32>} : memref<1x1xf32, #tpu.memory_space<vmem>>, vector<1x1xf32>,
    %c0_14 = arith.constant 0 : index
    %c0_15 = arith.constant 0 : index
    %32 = vector.load %arg7[%c0_14, %c0_15] : memref<1x1xf32, #tpu.memory_space<vmem>>, vector<1x1xf32>
    %33 = vector.shape_cast %14 : vector<2x512xf32> to vector<1x2x512xf32>
    %cst_16 = arith.constant dense<0.000000e+00> : vector<1xf32>
    %34 = vector.multi_reduction <add>, %33, %cst_16 [1, 2] : vector<1x2x512xf32> to vector<1xf32>
    %35 = vector.shape_cast %34 : vector<1xf32> to vector<1x1x1xf32>
    %36 = vector.extract %35[0, 0, 0] : f32 from vector<1x1x1xf32>
    %37 = vector.broadcast %36 : f32 to vector<1x1xf32>
    %38 = arith.addf %32, %37 : vector<1x1xf32>
    %c0_17 = arith.constant 0 : index
    %c0_18 = arith.constant 0 : index
    %39 = vector.load %arg7[%c0_17, %c0_18] : memref<1x1xf32, #tpu.memory_space<vmem>>, vector<1x1xf32>
    tpu.vector_store %arg7[%c0_17, %c0_18], %38 {strides = array<i32>} : memref<1x1xf32, #tpu.memory_space<vmem>>, vector<1x1xf32>,
    %c1_i32 = arith.constant 1 : i32
    %40 = arith.cmpi eq, %arg0, %c1_i32 : i32
    %41 = arith.extui %40 : i1 to i32
    %c0_i32_19 = arith.constant 0 : i32
    %42 = arith.cmpi ne, %41, %c0_i32_19 : i32
    scf.if %42 {
      %c0_20 = arith.constant 0 : index
      %c0_21 = arith.constant 0 : index
      %43 = vector.load %arg5[%c0_20, %c0_21] : memref<1x1xf32, #tpu.memory_space<vmem>>, vector<1x1xf32>
      %c0_22 = arith.constant 0 : index
      %c0_23 = arith.constant 0 : index
      %44 = vector.load %arg6[%c0_22, %c0_23] : memref<1x1xf32, #tpu.memory_space<vmem>>, vector<1x1xf32>
      %c0_24 = arith.constant 0 : index
      %c0_25 = arith.constant 0 : index
      %45 = vector.load %arg7[%c0_24, %c0_25] : memref<1x1xf32, #tpu.memory_space<vmem>>, vector<1x1xf32>
      %46 = arith.subf %44, %43 : vector<1x1xf32>
      %47 = arith.subf %45, %43 : vector<1x1xf32>
      %cst_26 = arith.constant 2.048000e+03 : f32
      %48 = vector.broadcast %cst_26 : f32 to vector<1x1xf32>
      %49 = arith.subf %48, %44 : vector<1x1xf32>
      %50 = arith.subf %49, %45 : vector<1x1xf32>
      %51 = arith.addf %50, %43 : vector<1x1xf32>
      %cst_27 = arith.constant 0.000000e+00 : f32
      %52 = vector.broadcast %cst_27 : f32 to vector<1x8xf32>
      %c0_28 = arith.constant 0 : index
      %c0_29 = arith.constant 0 : index
      %53 = vector.load %arg4[%c0_28, %c0_29] : memref<1x8xf32, #tpu.memory_space<vmem>>, vector<1x8xf32>
      tpu.vector_store %arg4[%c0_28, %c0_29], %52 {strides = array<i32>} : memref<1x8xf32, #tpu.memory_space<vmem>>, vector<1x8xf32>,
      %54 = arith.addf %43, %47 : vector<1x1xf32>
      %55 = arith.divf %43, %54 : vector<1x1xf32>
      %c0_30 = arith.constant 0 : index
      %c0_31 = arith.constant 0 : index
      %56 = vector.load %arg4[%c0_30, %c0_31] : memref<1x8xf32, #tpu.memory_space<vmem>>, vector<1x1xf32>
      tpu.vector_store %arg4[%c0_30, %c0_31], %55 {strides = array<i32>} : memref<1x8xf32, #tpu.memory_space<vmem>>, vector<1x1xf32>,
      %57 = arith.addf %51, %46 : vector<1x1xf32>
      %58 = arith.divf %51, %57 : vector<1x1xf32>
      %c0_32 = arith.constant 0 : index
      %c1_33 = arith.constant 1 : index
      %59 = vector.load %arg4[%c0_32, %c1_33] : memref<1x8xf32, #tpu.memory_space<vmem>>, vector<1x1xf32>
      tpu.vector_store %arg4[%c0_32, %c1_33], %58 {strides = array<i32>} : memref<1x8xf32, #tpu.memory_space<vmem>>, vector<1x1xf32>,
      %60 = arith.addf %51, %47 : vector<1x1xf32>
      %61 = arith.divf %46, %60 : vector<1x1xf32>
      %c0_34 = arith.constant 0 : index
      %c2 = arith.constant 2 : index
      %62 = vector.load %arg4[%c0_34, %c2] : memref<1x8xf32, #tpu.memory_space<vmem>>, vector<1x1xf32>
      tpu.vector_store %arg4[%c0_34, %c2], %61 {strides = array<i32>} : memref<1x8xf32, #tpu.memory_space<vmem>>, vector<1x1xf32>,
      %63 = arith.addf %43, %47 : vector<1x1xf32>
      %64 = arith.addf %63, %46 : vector<1x1xf32>
      %65 = arith.divf %43, %64 : vector<1x1xf32>
      %c0_35 = arith.constant 0 : index
      %c3 = arith.constant 3 : index
      %66 = vector.load %arg4[%c0_35, %c3] : memref<1x8xf32, #tpu.memory_space<vmem>>, vector<1x1xf32>
      tpu.vector_store %arg4[%c0_35, %c3], %65 {strides = array<i32>} : memref<1x8xf32, #tpu.memory_space<vmem>>, vector<1x1xf32>,
      %cst_36 = arith.constant 2.000000e+00 : f32
      %67 = vector.broadcast %cst_36 : f32 to vector<1x1xf32>
      %68 = arith.mulf %67, %43 : vector<1x1xf32>
      %cst_37 = arith.constant 2.000000e+00 : f32
      %69 = vector.broadcast %cst_37 : f32 to vector<1x1xf32>
      %70 = arith.mulf %69, %43 : vector<1x1xf32>
      %71 = arith.addf %70, %46 : vector<1x1xf32>
      %72 = arith.addf %71, %47 : vector<1x1xf32>
      %73 = arith.divf %68, %72 : vector<1x1xf32>
      %c0_38 = arith.constant 0 : index
      %c4 = arith.constant 4 : index
      %74 = vector.load %arg4[%c0_38, %c4] : memref<1x8xf32, #tpu.memory_space<vmem>>, vector<1x1xf32>
      tpu.vector_store %arg4[%c0_38, %c4], %73 {strides = array<i32>} : memref<1x8xf32, #tpu.memory_space<vmem>>, vector<1x1xf32>,
      %75 = arith.addf %43, %46 : vector<1x1xf32>
      %76 = arith.divf %43, %75 : vector<1x1xf32>
      %c0_39 = arith.constant 0 : index
      %c5 = arith.constant 5 : index
      %77 = vector.load %arg4[%c0_39, %c5] : memref<1x8xf32, #tpu.memory_space<vmem>>, vector<1x1xf32>
      tpu.vector_store %arg4[%c0_39, %c5], %76 {strides = array<i32>} : memref<1x8xf32, #tpu.memory_space<vmem>>, vector<1x1xf32>,
      %78 = arith.addf %51, %47 : vector<1x1xf32>
      %79 = arith.divf %51, %78 : vector<1x1xf32>
      %c0_40 = arith.constant 0 : index
      %c6 = arith.constant 6 : index
      %80 = vector.load %arg4[%c0_40, %c6] : memref<1x8xf32, #tpu.memory_space<vmem>>, vector<1x1xf32>
      tpu.vector_store %arg4[%c0_40, %c6], %79 {strides = array<i32>} : memref<1x8xf32, #tpu.memory_space<vmem>>, vector<1x1xf32>,
    } else {
    }
    return
  }
  func.func @transform_0(%arg0: i32) -> i32 {
    %c0_i32 = arith.constant 0 : i32
    %c0_i32_0 = arith.constant 0 : i32
    return %c0_i32 : i32
  }
  func.func @transform_1(%arg0: i32) -> (i32, i32) {
    %c0_i32 = arith.constant 0 : i32
    %c0_i32_0 = arith.constant 0 : i32
    return %c0_i32, %arg0 : i32, i32
  }
  func.func @transform_2(%arg0: i32) -> (i32, i32) {
    %c0_i32 = arith.constant 0 : i32
    %c0_i32_0 = arith.constant 0 : i32
    return %c0_i32, %arg0 : i32, i32
  }
  func.func @transform_3(%arg0: i32) -> (i32, i32) {
    %c0_i32 = arith.constant 0 : i32
    %c0_i32_0 = arith.constant 0 : i32
    %c0_i32_1 = arith.constant 0 : i32
    return %c0_i32, %c0_i32_0 : i32, i32
  }
}

</mosaic_0001>

<llo_original>
// kernel: dice_score.2
$region0: #{dice_score.2}
  #allocation0 [shape = 'u32[]', space=smem, size = 0x4, offset = 0x4, fixed_abs, tag = 'smem constant byte address 0x4 - core index']
  #allocation1 [shape = 'u32[144,128]{1,0:T(1,128)}', space=vmem, size = 0x12000, scoped, tag = 'internal scratch']
  #allocation2 [shape = 'f32[2,1]{1,0:T(2,128)}', space=vmem, size = 0x400, scoped, tag = 'scratch operand']
  #allocation3 [shape = 'f32[2,1]{1,0:T(2,128)}', space=vmem, size = 0x400, scoped, tag = 'scratch operand']
  #allocation4 [shape = 'f32[2,1]{1,0:T(2,128)}', space=vmem, size = 0x400, scoped, tag = 'scratch operand']
  #allocation5 [shape = 'f32[1,1]{1,0:T(1,128)}', space=vmem, size = 0x200, scoped, tag = 'scratch operand']
  #allocation6 [shape = 'f32[1,1]{1,0:T(1,128)}', space=vmem, size = 0x200, scoped, tag = 'scratch operand']
  #allocation7 [shape = 'f32[1,1]{1,0:T(1,128)}', space=vmem, size = 0x200, scoped, tag = 'scratch operand']
  #allocation8 [shape = 'f32[1,1]{1,0:T(1,128)}', space=vmem, size = 0x200, scoped, tag = 'scratch operand']
  %s0 = inlined_call_operand.vmem [shape: f32[2,1024], index: 0, kind: input, shape index: {}]
  %s1 = inlined_call_operand.vmem [shape: f32[2,1024], index: 1, kind: input, shape index: {}]
  %s2 = inlined_call_operand.vmem [shape: f32[1,8], index: 2, kind: output, shape index: {}]
  %s3 = sld [smem:[#allocation0]]
  $region49: #{dice_score.2} parent=0
    _
  %s5 = ssub.s32 1, %s3
  %s6 = scalar_select 0, %s5, %s3
  loop: start=0, step=1, limit=4
  $region2: #{dice_score.2} parent=0 // loop_pre_header
    _
  $region3: #{dice_score.2} parent=0 // loop_header
    %s8 = sphi 0, %s12
    %p9 = scmp.ge.s32.totalorder %s8, 4
    %s18 = sphi 0, %s20
    %s21 = sphi 0, %s18
    %s22 = sphi 0, %s21
    %s38 = sphi 0, %s22
    %s44 = sphi 0, %s46
    %s47 = sphi 0, %s44
    %s48 = sphi 0, %s47
    %s64 = sphi 0, %s48
    %s68 = sphi 0, %s68
    %s70 = sphi 0, %s68
    %s71 = sphi 0, %s70
    %s85 = sphi 0, %s71
  $region4: #{dice_score.2} parent=0 // loop_header_branch
    %11 = sbr.rel (%p9) target = $region8
  $region5: #{dice_score.2} parent=0 // loop_body
    %s13 = ssub.s32 %s8, 1
    %s14 = ssub.s32 %s8, 2
    %s15 = sadd.s32 %s8, 1
    %s16 = ssub.s32 %s8, %s15
    %p17 = scmp.eq.s32.totalorder %s16, 0
    %s19 = sadd.s32 %s18, 1
    %s20 = scalar_select %p17, %s18, %s19
    %p23 = pneg %p17
    %p24 = scmp.eq.s32.totalorder %s8, 1
    %p25 = por %p23, %p24
    %p26 = scmp.ne.s32.totalorder %s18, %s21
    %p27 = scmp.eq.s32.totalorder %s8, 0
    %p28 = por %p26, %p27
    %p29 = scmp.ne.s32.totalorder %s18, %s21
    %p30 = scmp.eq.s32.totalorder %s13, 1
    %p31 = por %p29, %p30
    %p32 = scmp.ne.s32.totalorder %s21, %s22
    %p33 = scmp.eq.s32.totalorder %s13, 0
    %p34 = por %p32, %p33
    %p35 = scmp.ne.s32.totalorder %s21, %s22
    %p36 = scmp.eq.s32.totalorder %s14, 1
    %p37 = por %p35, %p36
    %p39 = scmp.ne.s32.totalorder %s22, %s38
    %p40 = scmp.eq.s32.totalorder %s14, 0
    %p41 = por %p39, %p40
    %s42 = ssub.s32 %s8, %s15
    %p43 = scmp.eq.s32.totalorder %s42, 0
    %s45 = sadd.s32 %s44, 1
    %s46 = scalar_select %p43, %s44, %s45
    %p49 = pneg %p43
    %p50 = scmp.eq.s32.totalorder %s8, 1
    %p51 = por %p49, %p50
    %p52 = scmp.ne.s32.totalorder %s44, %s47
    %p53 = scmp.eq.s32.totalorder %s8, 0
    %p54 = por %p52, %p53
    %p55 = scmp.ne.s32.totalorder %s44, %s47
    %p56 = scmp.eq.s32.totalorder %s13, 1
    %p57 = por %p55, %p56
    %p58 = scmp.ne.s32.totalorder %s47, %s48
    %p59 = scmp.eq.s32.totalorder %s13, 0
    %p60 = por %p58, %p59
    %p61 = scmp.ne.s32.totalorder %s47, %s48
    %p62 = scmp.eq.s32.totalorder %s14, 1
    %p63 = por %p61, %p62
    %p65 = scmp.ne.s32.totalorder %s48, %s64
    %p66 = scmp.eq.s32.totalorder %s14, 0
    %p67 = por %p65, %p66
    %s69 = sadd.s32 %s68, 1
    %p72 = scmp.eq.s32.totalorder %s8, 1
    %p73 = scmp.ne.s32.totalorder %s68, %s70
    %p74 = scmp.eq.s32.totalorder %s8, 0
    %p75 = por %p73, %p74
    %p76 = scmp.ne.s32.totalorder %s68, %s70
    %p77 = scmp.eq.s32.totalorder %s13, 1
    %p78 = por %p76, %p77
    %p79 = scmp.ne.s32.totalorder %s70, %s71
    %p80 = scmp.eq.s32.totalorder %s13, 0
    %p81 = por %p79, %p80
    %p82 = scmp.ne.s32.totalorder %s70, %s71
    %p83 = scmp.eq.s32.totalorder %s14, 1
    %p84 = por %p82, %p83
    %p86 = scmp.ne.s32.totalorder %s71, %s85
    %p87 = scmp.eq.s32.totalorder %s14, 0
    %p88 = por %p86, %p87
    %p89 = scmp.le.s32.totalorder 1, %s8
    %p90 = scmp.lt.s32.totalorder %s8, 3
    %p91 = pnand %p89, %p90
    %p92 = pneg %p91
    // Predicated region
    $region9: #{dice_score.2} parent=5 // pred_check
      _
    $region10: #{dice_score.2} parent=5 // pred_check_branch
      %94 = sbr.rel (%p91) target = $region12
    $region11: #{dice_score.2} parent=5 // pred_region
      %s95 = ssub.s32 %s8, 1
    $region12: #{dice_score.2} parent=5 // pred_fallthru
      _
    %p96 = scmp.lt.s32.totalorder %s8, 2
    // Predicated region
    $region13: #{dice_score.2} parent=5 // pred_check
      %p97 = pneg %p96
    $region14: #{dice_score.2} parent=5 // pred_check_branch
      %99 = sbr.rel (%p97) target = $region16
    $region15: #{dice_score.2} parent=5 // pred_region
      // Predicated region
      $region17: #{dice_score.2} parent=15 // pred_check
        %p100 = pneg %p28
      $region18: #{dice_score.2} parent=15 // pred_check_branch
        %102 = sbr.rel (%p100) target = $region20
      $region19: #{dice_score.2} parent=15 // pred_region
        %s103 = smul.u32 4, %s8
        %p104 = scmp.lt.s32.totalorder %s103, 7
        %s105 = scalar_select %p104, %s103, 7
        %s106 = smul.addr %s105, 2
        %s107 = scalar_lea.vmem %s0, %s106
        %s108 = smul.u32 4, %s8
      $region20: #{dice_score.2} parent=15 // pred_fallthru
        _
      // Predicated region
      $region21: #{dice_score.2} parent=15 // pred_check
        %p109 = pneg %p54
      $region22: #{dice_score.2} parent=15 // pred_check_branch
        %111 = sbr.rel (%p109) target = $region24
      $region23: #{dice_score.2} parent=15 // pred_region
        %s112 = smul.u32 4, %s8
        %p113 = scmp.lt.s32.totalorder %s112, 7
        %s114 = scalar_select %p113, %s112, 7
        %s115 = smul.addr %s114, 2
        %s116 = scalar_lea.vmem %s1, %s115
        %s117 = smul.u32 4, %s8
      $region24: #{dice_score.2} parent=15 // pred_fallthru
        _
    $region16: #{dice_score.2} parent=5 // pred_fallthru
      _
    %p118 = scmp.le.s32.totalorder 1, %s8
    %p119 = scmp.lt.s32.totalorder %s8, 3
    %p120 = pnand %p118, %p119
    %p121 = pneg %p120
    // Predicated region
    $region25: #{dice_score.2} parent=5 // pred_check
      _
    $region26: #{dice_score.2} parent=5 // pred_check_branch
      %123 = sbr.rel (%p120) target = $region28
    $region27: #{dice_score.2} parent=5 // pred_region
      %s124 = ssub.s32 %s8, 1
      %s125 = smul.u32 4, %s13
      %p126 = scmp.lt.s32.totalorder %s125, 7
      %s127 = scalar_select %p126, %s125, 7
      %s128 = smul.addr %s127, 2
      %s129 = scalar_lea.vmem %s0, %s128
      %p130 = pneg %p34
      %p131 = pneg %p31
      %s132 = smul.u32 4, %s13
      %p133 = scmp.lt.s32.totalorder %s132, 7
      %s134 = scalar_select %p133, %s132, 7
      %s135 = smul.addr %s134, 2
      %s136 = scalar_lea.vmem %s1, %s135
      %p137 = pneg %p60
      %p138 = pneg %p57
      %p139 = pneg %p81
      %p140 = pneg %p78
      %s141 = smul.u32 4, %s13
      %p142 = scmp.lt.s32.totalorder %s141, 7
      %s143 = scalar_select %p142, %s141, 7
      %s144 = smul.addr %s143, 2
      %s145 = scalar_lea.vmem %s0, %s144
      %s146 = smul.u32 4, %s13
      %s147 = smul.u32 4, %s13
      %p148 = scmp.lt.s32.totalorder %s147, 7
      %s149 = scalar_select %p148, %s147, 7
      %s150 = smul.addr %s149, 2
      %s151 = scalar_lea.vmem %s1, %s150
      %s152 = smul.u32 4, %s13
      %p153 = scmp.eq.s32.totalorder %s13, 0
      // Predicated region
      $region29: #{dice_score.2} parent=27 // pred_check
        %p154 = pneg %p153
      $region30: #{dice_score.2} parent=27 // pred_check_branch
        %156 = sbr.rel (%p154) target = $region32
      $region31: #{dice_score.2} parent=27 // pred_region
        %vm157 = vcmask 1024
        %158 = vst.msk [vmem:[#allocation2] sm:$0x3] %vm157, 0.0
        %159 = vst.msk [vmem:[#allocation3] sm:$0x3] %vm157, 0.0
        %160 = vst.msk [vmem:[#allocation4] sm:$0x3] %vm157, 0.0
        %vm161 = vcmask 0
        %162 = vst.msk [vmem:[#allocation5] sm:$0x1] %vm161, inf
        %163 = vst.msk [vmem:[#allocation6] sm:$0x1] %vm161, -inf
        %164 = vst.msk [vmem:[#allocation7] sm:$0x1] %vm161, inf
        %165 = vst.msk [vmem:[#allocation8] sm:$0x1] %vm161, -inf
      $region32: #{dice_score.2} parent=27 // pred_fallthru
        _
      %v166 = vld [vmem:[%s145] sm:$0xff]
      %v167 = vld [vmem:[%s151] sm:$0xff]
      %vm168 = vcmp.gt.f32.partialorder %v166, 0.0
      %v169 = vsel %vm168, 1, 0
      %v170 = vcvt.s32.f32 %v169
      %vm171 = vcmp.gt.f32.partialorder %v167, 0.5
      %v172 = vsel %vm171, 1, 0
      %v173 = vcvt.s32.f32 %v172
      %v174 = vld [vmem:[#allocation2] sm:$0x3]
      %v175 = vmul.f32 %v170, %v173
      %v177 = vcombine.high %v175, %v175
      %v179 = vunpack.c.l.s4 1983009808
      %v180 = vunpack.c.0.s8 %v179
      %v181 = vlaneseq
      %v182 = vshrl.u32 %v181, 7
      %v183 = vsub.s32 %v180, %v182
      %v184 = vrot.slane %v175, %v183
      %v186 = vunpack.c.l.s4 1983009808
      %v187 = vunpack.c.0.s8 %v186
      %v188 = vlaneseq
      %v189 = vshrl.u32 %v188, 7
      %v190 = vsub.s32 %v187, %v189
      %v191 = vrot.slane %v177, %v190
      %v192 = vcombine.high %v184, %v184
      %v193 = vcombine.high %v191, %v191
      %vm198 = vcmask 1041408
      %v199 = vsel %vm198, %v184, 0.0
      %v200 = vsel %vm198, %v192, 0.0
      %v201 = vadd.f32 %v199, %v200
      %v202 = vsel %vm198, %v191, 0.0
      %v203 = vadd.f32 %v201, %v202
      %v204 = vsel %vm198, %v193, 0.0
      %v205 = vadd.f32 %v203, %v204
      %206 = vadd.xlane.f32.xlu0 %v205
      %v207 = vpop.xlane.xlu0 %206
      %v208 = vadd.f32 %v174, %v207
      %vm209 = vcmask 1024
      %210 = vst.msk [vmem:[#allocation2] sm:$0x3] %vm209, %v208
      %v211 = vld [vmem:[#allocation3] sm:$0x3]
      %v213 = vcombine.high %v170, %v170
      %v215 = vunpack.c.l.s4 1983009808
      %v216 = vunpack.c.0.s8 %v215
      %v217 = vlaneseq
      %v218 = vshrl.u32 %v217, 7
      %v219 = vsub.s32 %v216, %v218
      %v220 = vrot.slane %v170, %v219
      %v222 = vunpack.c.l.s4 1983009808
      %v223 = vunpack.c.0.s8 %v222
      %v224 = vlaneseq
      %v225 = vshrl.u32 %v224, 7
      %v226 = vsub.s32 %v223, %v225
      %v227 = vrot.slane %v213, %v226
      %v228 = vcombine.high %v220, %v220
      %v229 = vcombine.high %v227, %v227
      %v234 = vsel %vm198, %v220, 0.0
      %v235 = vsel %vm198, %v228, 0.0
      %v236 = vadd.f32 %v234, %v235
      %v237 = vsel %vm198, %v227, 0.0
      %v238 = vadd.f32 %v236, %v237
      %v239 = vsel %vm198, %v229, 0.0
      %v240 = vadd.f32 %v238, %v239
      %241 = vadd.xlane.f32.xlu0 %v240
      %v242 = vpop.xlane.xlu0 %241
      %v243 = vadd.f32 %v211, %v242
      %244 = vst.msk [vmem:[#allocation3] sm:$0x3] %vm209, %v243
      %v245 = vld [vmem:[#allocation4] sm:$0x3]
      %v247 = vcombine.high %v173, %v173
      %v249 = vunpack.c.l.s4 1983009808
      %v250 = vunpack.c.0.s8 %v249
      %v251 = vlaneseq
      %v252 = vshrl.u32 %v251, 7
      %v253 = vsub.s32 %v250, %v252
      %v254 = vrot.slane %v173, %v253
      %v256 = vunpack.c.l.s4 1983009808
      %v257 = vunpack.c.0.s8 %v256
      %v258 = vlaneseq
      %v259 = vshrl.u32 %v258, 7
      %v260 = vsub.s32 %v257, %v259
      %v261 = vrot.slane %v247, %v260
      %v262 = vcombine.high %v254, %v254
      %v263 = vcombine.high %v261, %v261
      %v268 = vsel %vm198, %v254, 0.0
      %v269 = vsel %vm198, %v262, 0.0
      %v270 = vadd.f32 %v268, %v269
      %v271 = vsel %vm198, %v261, 0.0
      %v272 = vadd.f32 %v270, %v271
      %v273 = vsel %vm198, %v263, 0.0
      %v274 = vadd.f32 %v272, %v273
      %275 = vadd.xlane.f32.xlu0 %v274
      %v276 = vpop.xlane.xlu0 %275
      %v277 = vadd.f32 %v245, %v276
      %278 = vst.msk [vmem:[#allocation4] sm:$0x3] %vm209, %v277
      %v279 = vld [vmem:[#allocation5] sm:$0x1]
      %v281 = vcombine.high %v166, %v166
      %v283 = vunpack.c.l.s4 1983009808
      %v284 = vunpack.c.0.s8 %v283
      %v285 = vlaneseq
      %v286 = vshrl.u32 %v285, 7
      %v287 = vsub.s32 %v284, %v286
      %v288 = vrot.slane %v166, %v287
      %v290 = vunpack.c.l.s4 1983009808
      %v291 = vunpack.c.0.s8 %v290
      %v292 = vlaneseq
      %v293 = vshrl.u32 %v292, 7
      %v294 = vsub.s32 %v291, %v293
      %v295 = vrot.slane %v281, %v294
      %v296 = vcombine.high %v288, %v288
      %v297 = vcombine.high %v295, %v295
      %v302 = vsel %vm198, %v288, inf
      %v303 = vsel %vm198, %v296, inf
      %v304 = vsel %vm198, %v295, inf
      %v305 = vsel %vm198, %v297, inf
      %v306 = vmin.f32 %v302, %v303
      %v307 = vmin.f32 %v304, %v305
      %v308 = vmin.f32 %v306, %v307
      %309 = vmin.xlane.f32.xlu0 %v308
      %v310 = vpop.xlane.xlu0 %309
      %v311 = vrot.slane %v310, 4
      %v312 = vmin.f32 %v310, %v311
      %v313 = vrot.slane %v312, 2
      %v314 = vmin.f32 %v312, %v313
      %v315 = vrot.slane %v314, 1
      %v316 = vmin.f32 %v314, %v315
      %s317 = vtos %v316
      %v318 = vstv %s317
      %v319 = vmin.f32 %v279, %v318
      %vm320 = vcmask 0
      %321 = vst.msk [vmem:[#allocation5] sm:$0x1] %vm320, %v319
      %v322 = vld [vmem:[#allocation6] sm:$0x1]
      %v323 = vsel %vm198, %v288, -inf
      %v324 = vsel %vm198, %v296, -inf
      %v325 = vsel %vm198, %v295, -inf
      %v326 = vsel %vm198, %v297, -inf
      %v327 = vmax.f32 %v323, %v324
      %v328 = vmax.f32 %v325, %v326
      %v329 = vmax.f32 %v327, %v328
      %330 = vmax.xlane.f32.xlu0 %v329
      %v331 = vpop.xlane.xlu0 %330
      %v332 = vrot.slane %v331, 4
      %v333 = vmax.f32 %v331, %v332
      %v334 = vrot.slane %v333, 2
      %v335 = vmax.f32 %v333, %v334
      %v336 = vrot.slane %v335, 1
      %v337 = vmax.f32 %v335, %v336
      %s338 = vtos %v337
      %v339 = vstv %s338
      %v340 = vmax.f32 %v322, %v339
      %341 = vst.msk [vmem:[#allocation6] sm:$0x1] %vm320, %v340
      %v342 = vld [vmem:[#allocation7] sm:$0x1]
      %v344 = vcombine.high %v167, %v167
      %v346 = vunpack.c.l.s4 1983009808
      %v347 = vunpack.c.0.s8 %v346
      %v348 = vlaneseq
      %v349 = vshrl.u32 %v348, 7
      %v350 = vsub.s32 %v347, %v349
      %v351 = vrot.slane %v167, %v350
      %v353 = vunpack.c.l.s4 1983009808
      %v354 = vunpack.c.0.s8 %v353
      %v355 = vlaneseq
      %v356 = vshrl.u32 %v355, 7
      %v357 = vsub.s32 %v354, %v356
      %v358 = vrot.slane %v344, %v357
      %v359 = vcombine.high %v351, %v351
      %v360 = vcombine.high %v358, %v358
      %v365 = vsel %vm198, %v351, inf
      %v366 = vsel %vm198, %v359, inf
      %v367 = vsel %vm198, %v358, inf
      %v368 = vsel %vm198, %v360, inf
      %v369 = vmin.f32 %v365, %v366
      %v370 = vmin.f32 %v367, %v368
      %v371 = vmin.f32 %v369, %v370
      %372 = vmin.xlane.f32.xlu0 %v371
      %v373 = vpop.xlane.xlu0 %372
      %v374 = vrot.slane %v373, 4
      %v375 = vmin.f32 %v373, %v374
      %v376 = vrot.slane %v375, 2
      %v377 = vmin.f32 %v375, %v376
      %v378 = vrot.slane %v377, 1
      %v379 = vmin.f32 %v377, %v378
      %s380 = vtos %v379
      %v381 = vstv %s380
      %v382 = vmin.f32 %v342, %v381
      %383 = vst.msk [vmem:[#allocation7] sm:$0x1] %vm320, %v382
      %v384 = vld [vmem:[#allocation8] sm:$0x1]
      %v385 = vsel %vm198, %v351, -inf
      %v386 = vsel %vm198, %v359, -inf
      %v387 = vsel %vm198, %v358, -inf
      %v388 = vsel %vm198, %v360, -inf
      %v389 = vmax.f32 %v385, %v386
      %v390 = vmax.f32 %v387, %v388
      %v391 = vmax.f32 %v389, %v390
      %392 = vmax.xlane.f32.xlu0 %v391
      %v393 = vpop.xlane.xlu0 %392
      %v394 = vrot.slane %v393, 4
      %v395 = vmax.f32 %v393, %v394
      %v396 = vrot.slane %v395, 2
      %v397 = vmax.f32 %v395, %v396
      %v398 = vrot.slane %v397, 1
      %v399 = vmax.f32 %v397, %v398
      %s400 = vtos %v399
      %v401 = vstv %s400
      %v402 = vmax.f32 %v384, %v401
      %403 = vst.msk [vmem:[#allocation8] sm:$0x1] %vm320, %v402
      %p404 = scmp.eq.s32.totalorder %s13, 1
      // Predicated region
      $region33: #{dice_score.2} parent=27 // pred_check
        %p405 = pneg %p404
      $region34: #{dice_score.2} parent=27 // pred_check_branch
        %407 = sbr.rel (%p405) target = $region36
      $region35: #{dice_score.2} parent=27 // pred_region
        %v408 = vld [vmem:[#allocation2] sm:$0x3]
        %v409 = vadd.f32 %v408, 1.0
        %v410 = vmul.f32 %v409, 2.0
        %v411 = vld [vmem:[#allocation3] sm:$0x3]
        %v412 = vld [vmem:[#allocation4] sm:$0x3]
        %v413 = vadd.f32 %v411, %v412
        %v414 = vadd.f32 %v413, 1.0
        %v415 = vrcp.pop %v414
        %v416 = vmul.f32 %v410, %v415
        %v417 = vsel %vm209, %v416, 0.0
        %418 = vadd.xlane.f32.xlu0 %v417
        %v419 = vpop.xlane.xlu0 %418
        %v420 = vrot.slane %v419, 4
        %v421 = vadd.f32 %v419, %v420
        %v422 = vrot.slane %v421, 2
        %v423 = vadd.f32 %v421, %v422
        %v424 = vrot.slane %v423, 1
        %v425 = vadd.f32 %v423, %v424
        %s426 = vtos %v425
        %v427 = vstv %s426
        %v428 = vrcp.pop 2.0
        %v429 = vmul.f32 %v427, %v428
        %vm430 = vcmask 57344
        %431 = vst.msk [vmem:[%s2] sm:$0x1] %vm430, 0.0
        %432 = vst.msk [vmem:[%s2] sm:$0x1] %vm320, %v429
        %v433 = vld [vmem:[#allocation5] sm:$0x1]
        %v435 = vlaneseq
        %v436 = vshrl.u32 %v435, 7
        %v437 = vsub.s32 0, %v436
        %v438 = vrot.slane %v433, %v437
        %439 = vrot.lane.b32.xlu0 %v438, 1
        %v440 = vpop.permute.xlu0 %439
        %vm442 = vcmask 8200
        %443 = vst.msk [vmem:[%s2] sm:$0x1] %vm442, %v440
        %v444 = vld [vmem:[#allocation6] sm:$0x1]
        %v446 = vlaneseq
        %v447 = vshrl.u32 %v446, 7
        %v448 = vsub.s32 0, %v447
        %v449 = vrot.slane %v444, %v448
        %450 = vrot.lane.b32.xlu0 %v449, 2
        %v451 = vpop.permute.xlu0 %450
        %vm453 = vcmask 16400
        %454 = vst.msk [vmem:[%s2] sm:$0x1] %vm453, %v451
        %v455 = vld [vmem:[#allocation7] sm:$0x1]
        %v457 = vlaneseq
        %v458 = vshrl.u32 %v457, 7
        %v459 = vsub.s32 0, %v458
        %v460 = vrot.slane %v455, %v459
        %461 = vrot.lane.b32.xlu0 %v460, 3
        %v462 = vpop.permute.xlu0 %461
        %vm464 = vcmask 24600
        %465 = vst.msk [vmem:[%s2] sm:$0x1] %vm464, %v462
        %v466 = vld [vmem:[#allocation8] sm:$0x1]
        %v468 = vlaneseq
        %v469 = vshrl.u32 %v468, 7
        %v470 = vsub.s32 0, %v469
        %v471 = vrot.slane %v466, %v470
        %472 = vrot.lane.b32.xlu0 %v471, 4
        %v473 = vpop.permute.xlu0 %472
        %vm475 = vcmask 32800
        %476 = vst.msk [vmem:[%s2] sm:$0x1] %vm475, %v473
      $region36: #{dice_score.2} parent=27 // pred_fallthru
        _
      // Predicated region
      $region37: #{dice_score.2} parent=27 // pred_check
        %p477 = pneg %p78
      $region38: #{dice_score.2} parent=27 // pred_check_branch
        %479 = sbr.rel (%p477) target = $region40
      $region39: #{dice_score.2} parent=27 // pred_region
        _
      $region40: #{dice_score.2} parent=27 // pred_fallthru
        _
      // Predicated region
      $region41: #{dice_score.2} parent=27 // pred_check
        %p480 = pneg %p78
      $region42: #{dice_score.2} parent=27 // pred_check_branch
        %482 = sbr.rel (%p480) target = $region44
      $region43: #{dice_score.2} parent=27 // pred_region
        _
      $region44: #{dice_score.2} parent=27 // pred_fallthru
        _
    $region28: #{dice_score.2} parent=5 // pred_fallthru
      _
    %p483 = scmp.le.s32.totalorder 2, %s8
    // Predicated region
    $region45: #{dice_score.2} parent=5 // pred_check
      %p484 = pneg %p483
    $region46: #{dice_score.2} parent=5 // pred_check_branch
      %486 = sbr.rel (%p484) target = $region48
    $region47: #{dice_score.2} parent=5 // pred_region
      %s487 = ssub.s32 %s8, 2
    $region48: #{dice_score.2} parent=5 // pred_fallthru
      _
  $region6: #{dice_score.2} parent=0 // loop_footer
    %s12 = sadd.s32 1, %s8
  $region7: #{dice_score.2} parent=0 // loop_footer_branch
    %7 = sbr.rel target = $region3
  $region8: #{dice_score.2} parent=0 // loop_exit
    _

// kernel: dice_score.3
$region0: #{dice_score.3}
  #allocation0 [shape = 'u32[]', space=smem, size = 0x4, offset = 0x4, fixed_abs, tag = 'smem constant byte address 0x4 - core index']
  #allocation1 [shape = 'u32[144,128]{1,0:T(1,128)}', space=vmem, size = 0x12000, scoped, tag = 'internal scratch']
  #allocation2 [shape = 'f32[1,1]{1,0:T(1,128)}', space=vmem, size = 0x200, scoped, tag = 'scratch operand']
  #allocation3 [shape = 'f32[1,1]{1,0:T(1,128)}', space=vmem, size = 0x200, scoped, tag = 'scratch operand']
  #allocation4 [shape = 'f32[1,1]{1,0:T(1,128)}', space=vmem, size = 0x200, scoped, tag = 'scratch operand']
  %s0 = inlined_call_operand.vmem [shape: f32[2], index: 0, kind: input, shape index: {}]
  %s1 = inlined_call_operand.vmem [shape: f32[2,1024], index: 1, kind: input, shape index: {}]
  %s2 = inlined_call_operand.vmem [shape: f32[2,1024], index: 2, kind: input, shape index: {}]
  %s3 = inlined_call_operand.vmem [shape: f32[1,8], index: 3, kind: output, shape index: {}]
  %s4 = sld [smem:[#allocation0]]
  $region57: #{dice_score.3} parent=0
    _
  %s6 = ssub.s32 1, %s4
  %s7 = scalar_select 0, %s6, %s4
  $region1: #{dice_score.3} parent=0
    #allocation5 [shape = 'u8[512]{0}', space=smem, size = 0x200, scoped, tag = 'input window, operand 0, single buffered']
    #allocation6 [shape = 's32[2]{0}', space=sflag, size = 0x8, scoped, tag = 'scoped memory for dice_score.3']
    %8 = vsyncpa [#allocation6], 0
    loop: start=0, step=1, limit=4
    $region2: #{dice_score.3} parent=1 // loop_pre_header
      _
    $region3: #{dice_score.3} parent=1 // loop_header
      %s10 = sphi 0, %s14
      %p11 = scmp.ge.s32.totalorder %s10, 4
      %s18 = sphi 0, %s18
      %s20 = sphi 0, %s18
      %s21 = sphi 0, %s20
      %s35 = sphi 0, %s21
      %s41 = sphi 0, %s43
      %s44 = sphi 0, %s41
      %s45 = sphi 0, %s44
      %s61 = sphi 0, %s45
      %s67 = sphi 0, %s69
      %s70 = sphi 0, %s67
      %s71 = sphi 0, %s70
      %s87 = sphi 0, %s71
      %s91 = sphi 0, %s91
      %s93 = sphi 0, %s91
      %s94 = sphi 0, %s93
      %s108 = sphi 0, %s94
    $region4: #{dice_score.3} parent=1 // loop_header_branch
      %13 = sbr.rel (%p11) target = $region8
    $region5: #{dice_score.3} parent=1 // loop_body
      %s15 = ssub.s32 %s10, 1
      %s16 = ssub.s32 %s10, 2
      %s17 = sadd.s32 %s10, 1
      %s19 = sadd.s32 %s18, 1
      %p22 = scmp.eq.s32.totalorder %s10, 1
      %p23 = scmp.ne.s32.totalorder %s18, %s20
      %p24 = scmp.eq.s32.totalorder %s10, 0
      %p25 = por %p23, %p24
      %p26 = scmp.ne.s32.totalorder %s18, %s20
      %p27 = scmp.eq.s32.totalorder %s15, 1
      %p28 = por %p26, %p27
      %p29 = scmp.ne.s32.totalorder %s20, %s21
      %p30 = scmp.eq.s32.totalorder %s15, 0
      %p31 = por %p29, %p30
      %p32 = scmp.ne.s32.totalorder %s20, %s21
      %p33 = scmp.eq.s32.totalorder %s16, 1
      %p34 = por %p32, %p33
      %p36 = scmp.ne.s32.totalorder %s21, %s35
      %p37 = scmp.eq.s32.totalorder %s16, 0
      %p38 = por %p36, %p37
      %s39 = ssub.s32 %s10, %s17
      %p40 = scmp.eq.s32.totalorder %s39, 0
      %s42 = sadd.s32 %s41, 1
      %s43 = scalar_select %p40, %s41, %s42
      %p46 = pneg %p40
      %p47 = scmp.eq.s32.totalorder %s10, 1
      %p48 = por %p46, %p47
      %p49 = scmp.ne.s32.totalorder %s41, %s44
      %p50 = scmp.eq.s32.totalorder %s10, 0
      %p51 = por %p49, %p50
      %p52 = scmp.ne.s32.totalorder %s41, %s44
      %p53 = scmp.eq.s32.totalorder %s15, 1
      %p54 = por %p52, %p53
      %p55 = scmp.ne.s32.totalorder %s44, %s45
      %p56 = scmp.eq.s32.totalorder %s15, 0
      %p57 = por %p55, %p56
      %p58 = scmp.ne.s32.totalorder %s44, %s45
      %p59 = scmp.eq.s32.totalorder %s16, 1
      %p60 = por %p58, %p59
      %p62 = scmp.ne.s32.totalorder %s45, %s61
      %p63 = scmp.eq.s32.totalorder %s16, 0
      %p64 = por %p62, %p63
      %s65 = ssub.s32 %s10, %s17
      %p66 = scmp.eq.s32.totalorder %s65, 0
      %s68 = sadd.s32 %s67, 1
      %s69 = scalar_select %p66, %s67, %s68
      %p72 = pneg %p66
      %p73 = scmp.eq.s32.totalorder %s10, 1
      %p74 = por %p72, %p73
      %p75 = scmp.ne.s32.totalorder %s67, %s70
      %p76 = scmp.eq.s32.totalorder %s10, 0
      %p77 = por %p75, %p76
      %p78 = scmp.ne.s32.totalorder %s67, %s70
      %p79 = scmp.eq.s32.totalorder %s15, 1
      %p80 = por %p78, %p79
      %p81 = scmp.ne.s32.totalorder %s70, %s71
      %p82 = scmp.eq.s32.totalorder %s15, 0
      %p83 = por %p81, %p82
      %p84 = scmp.ne.s32.totalorder %s70, %s71
      %p85 = scmp.eq.s32.totalorder %s16, 1
      %p86 = por %p84, %p85
      %p88 = scmp.ne.s32.totalorder %s71, %s87
      %p89 = scmp.eq.s32.totalorder %s16, 0
      %p90 = por %p88, %p89
      %s92 = sadd.s32 %s91, 1
      %p95 = scmp.eq.s32.totalorder %s10, 1
      %p96 = scmp.ne.s32.totalorder %s91, %s93
      %p97 = scmp.eq.s32.totalorder %s10, 0
      %p98 = por %p96, %p97
      %p99 = scmp.ne.s32.totalorder %s91, %s93
      %p100 = scmp.eq.s32.totalorder %s15, 1
      %p101 = por %p99, %p100
      %p102 = scmp.ne.s32.totalorder %s93, %s94
      %p103 = scmp.eq.s32.totalorder %s15, 0
      %p104 = por %p102, %p103
      %p105 = scmp.ne.s32.totalorder %s93, %s94
      %p106 = scmp.eq.s32.totalorder %s16, 1
      %p107 = por %p105, %p106
      %p109 = scmp.ne.s32.totalorder %s94, %s108
      %p110 = scmp.eq.s32.totalorder %s16, 0
      %p111 = por %p109, %p110
      %p112 = scmp.le.s32.totalorder 1, %s10
      %p113 = scmp.lt.s32.totalorder %s10, 3
      %p114 = pnand %p112, %p113
      %p115 = pneg %p114
      // Predicated region
      $region9: #{dice_score.3} parent=5 // pred_check
        _
      $region10: #{dice_score.3} parent=5 // pred_check_branch
        %117 = sbr.rel (%p114) target = $region12
      $region11: #{dice_score.3} parent=5 // pred_region
        %s118 = ssub.s32 %s10, 1
        // Predicated region
        $region13: #{dice_score.3} parent=11 // pred_check
          %p119 = pneg %p31
        $region14: #{dice_score.3} parent=11 // pred_check_branch
          %121 = sbr.rel (%p119) target = $region16
        $region15: #{dice_score.3} parent=11 // pred_region
          %s123 = ssub.s32 16, 16
          %124 = vsyncadd [#allocation6], %s123
          %s126 = sshll.u32 %s0, 4
          %s127 = int_to_ptr.vmem [resolvable:$true] %s126
          %129 = dma.vmem_to_smem %s127, 16, [#allocation5], [#allocation6]
        $region16: #{dice_score.3} parent=11 // pred_fallthru
          _
      $region12: #{dice_score.3} parent=5 // pred_fallthru
        _
      %p130 = scmp.lt.s32.totalorder %s10, 2
      // Predicated region
      $region17: #{dice_score.3} parent=5 // pred_check
        %p131 = pneg %p130
      $region18: #{dice_score.3} parent=5 // pred_check_branch
        %133 = sbr.rel (%p131) target = $region20
      $region19: #{dice_score.3} parent=5 // pred_region
        // Predicated region
        $region21: #{dice_score.3} parent=19 // pred_check
          %p134 = pneg %p51
        $region22: #{dice_score.3} parent=19 // pred_check_branch
          %136 = sbr.rel (%p134) target = $region24
        $region23: #{dice_score.3} parent=19 // pred_region
          %s137 = smul.u32 4, %s10
          %p138 = scmp.lt.s32.totalorder %s137, 7
          %s139 = scalar_select %p138, %s137, 7
          %s140 = smul.addr %s139, 2
          %s141 = scalar_lea.vmem %s1, %s140
          %s142 = smul.u32 4, %s10
        $region24: #{dice_score.3} parent=19 // pred_fallthru
          _
        // Predicated region
        $region25: #{dice_score.3} parent=19 // pred_check
          %p143 = pneg %p77
        $region26: #{dice_score.3} parent=19 // pred_check_branch
          %145 = sbr.rel (%p143) target = $region28
        $region27: #{dice_score.3} parent=19 // pred_region
          %s146 = smul.u32 4, %s10
          %p147 = scmp.lt.s32.totalorder %s146, 7
          %s148 = scalar_select %p147, %s146, 7
          %s149 = smul.addr %s148, 2
          %s150 = scalar_lea.vmem %s2, %s149
          %s151 = smul.u32 4, %s10
        $region28: #{dice_score.3} parent=19 // pred_fallthru
          _
      $region20: #{dice_score.3} parent=5 // pred_fallthru
        _
      %p152 = scmp.le.s32.totalorder 1, %s10
      %p153 = scmp.lt.s32.totalorder %s10, 3
      %p154 = pnand %p152, %p153
      %p155 = pneg %p154
      // Predicated region
      $region29: #{dice_score.3} parent=5 // pred_check
        _
      $region30: #{dice_score.3} parent=5 // pred_check_branch
        %157 = sbr.rel (%p154) target = $region32
      $region31: #{dice_score.3} parent=5 // pred_region
        %s158 = ssub.s32 %s10, 1
        // Predicated region
        $region33: #{dice_score.3} parent=31 // pred_check
          %p159 = pneg %p31
        $region34: #{dice_score.3} parent=31 // pred_check_branch
          %161 = sbr.rel (%p159) target = $region36
        $region35: #{dice_score.3} parent=31 // pred_region
          %162 = dma.done [#allocation6], 16
        $region36: #{dice_score.3} parent=31 // pred_fallthru
          _
        %163 = sfence
        %p164 = pneg %p31
        %p165 = pneg %p28
        %s166 = smul.u32 4, %s15
        %p167 = scmp.lt.s32.totalorder %s166, 7
        %s168 = scalar_select %p167, %s166, 7
        %s169 = smul.addr %s168, 2
        %s170 = scalar_lea.vmem %s1, %s169
        %p171 = pneg %p57
        %p172 = pneg %p54
        %s173 = smul.u32 4, %s15
        %p174 = scmp.lt.s32.totalorder %s173, 7
        %s175 = scalar_select %p174, %s173, 7
        %s176 = smul.addr %s175, 2
        %s177 = scalar_lea.vmem %s2, %s176
        %p178 = pneg %p83
        %p179 = pneg %p80
        %p180 = pneg %p104
        %p181 = pneg %p101
        %s182 = smul.u32 4, %s15
        %p183 = scmp.lt.s32.totalorder %s182, 7
        %s184 = scalar_select %p183, %s182, 7
        %s185 = smul.addr %s184, 2
        %s186 = scalar_lea.vmem %s1, %s185
        %s187 = smul.u32 4, %s15
        %s188 = smul.u32 4, %s15
        %p189 = scmp.lt.s32.totalorder %s188, 7
        %s190 = scalar_select %p189, %s188, 7
        %s191 = smul.addr %s190, 2
        %s192 = scalar_lea.vmem %s2, %s191
        %s193 = smul.u32 4, %s15
        %p194 = scmp.eq.s32.totalorder %s15, 0
        // Predicated region
        $region37: #{dice_score.3} parent=31 // pred_check
          %p195 = pneg %p194
        $region38: #{dice_score.3} parent=31 // pred_check_branch
          %197 = sbr.rel (%p195) target = $region40
        $region39: #{dice_score.3} parent=31 // pred_region
          %vm198 = vcmask 0
          %199 = vst.msk [vmem:[#allocation2] sm:$0x1] %vm198, 0.0
          %200 = vst.msk [vmem:[#allocation3] sm:$0x1] %vm198, 0.0
          %201 = vst.msk [vmem:[#allocation4] sm:$0x1] %vm198, 0.0
        $region40: #{dice_score.3} parent=31 // pred_fallthru
          _
        %v202 = vld [vmem:[%s186] sm:$0xff]
        %v203 = vld [vmem:[%s192] sm:$0xff]
        %s204 = sld [smem:[#allocation5]]
        %s205 = sld [smem:[#allocation5 + $0x1]]
        %v206 = vstv %s204
        %vm207 = vcmp.ge.f32.partialorder %v202, %v206
        %v208 = vsel %vm207, 1, 0
        %v209 = vcvt.s32.f32 %v208
        %v210 = vstv %s205
        %vm211 = vcmp.ge.f32.partialorder %v203, %v210
        %v212 = vsel %vm211, 1, 0
        %v213 = vcvt.s32.f32 %v212
        %v214 = vld [vmem:[#allocation2] sm:$0x1]
        %v215 = vmul.f32 %v209, %v213
        %v217 = vcombine.high %v215, %v215
        %v219 = vunpack.c.l.s4 1983009808
        %v220 = vunpack.c.0.s8 %v219
        %v221 = vlaneseq
        %v222 = vshrl.u32 %v221, 7
        %v223 = vsub.s32 %v220, %v222
        %v224 = vrot.slane %v215, %v223
        %v226 = vunpack.c.l.s4 1983009808
        %v227 = vunpack.c.0.s8 %v226
        %v228 = vlaneseq
        %v229 = vshrl.u32 %v228, 7
        %v230 = vsub.s32 %v227, %v229
        %v231 = vrot.slane %v217, %v230
        %v232 = vcombine.high %v224, %v224
        %v233 = vcombine.high %v231, %v231
        %vm238 = vcmask 1041408
        %v239 = vsel %vm238, %v224, 0.0
        %v240 = vsel %vm238, %v232, 0.0
        %v241 = vadd.f32 %v239, %v240
        %v242 = vsel %vm238, %v231, 0.0
        %v243 = vadd.f32 %v241, %v242
        %v244 = vsel %vm238, %v233, 0.0
        %v245 = vadd.f32 %v243, %v244
        %246 = vadd.xlane.f32.xlu0 %v245
        %v247 = vpop.xlane.xlu0 %246
        %v248 = vrot.slane %v247, 4
        %v249 = vadd.f32 %v247, %v248
        %v250 = vrot.slane %v249, 2
        %v251 = vadd.f32 %v249, %v250
        %v252 = vrot.slane %v251, 1
        %v253 = vadd.f32 %v251, %v252
        %s254 = vtos %v253
        %v255 = vstv %s254
        %v256 = vadd.f32 %v214, %v255
        %vm257 = vcmask 0
        %258 = vst.msk [vmem:[#allocation2] sm:$0x1] %vm257, %v256
        %v259 = vld [vmem:[#allocation3] sm:$0x1]
        %v261 = vcombine.high %v209, %v209
        %v263 = vunpack.c.l.s4 1983009808
        %v264 = vunpack.c.0.s8 %v263
        %v265 = vlaneseq
        %v266 = vshrl.u32 %v265, 7
        %v267 = vsub.s32 %v264, %v266
        %v268 = vrot.slane %v209, %v267
        %v270 = vunpack.c.l.s4 1983009808
        %v271 = vunpack.c.0.s8 %v270
        %v272 = vlaneseq
        %v273 = vshrl.u32 %v272, 7
        %v274 = vsub.s32 %v271, %v273
        %v275 = vrot.slane %v261, %v274
        %v276 = vcombine.high %v268, %v268
        %v277 = vcombine.high %v275, %v275
        %v282 = vsel %vm238, %v268, 0.0
        %v283 = vsel %vm238, %v276, 0.0
        %v284 = vadd.f32 %v282, %v283
        %v285 = vsel %vm238, %v275, 0.0
        %v286 = vadd.f32 %v284, %v285
        %v287 = vsel %vm238, %v277, 0.0
        %v288 = vadd.f32 %v286, %v287
        %289 = vadd.xlane.f32.xlu0 %v288
        %v290 = vpop.xlane.xlu0 %289
        %v291 = vrot.slane %v290, 4
        %v292 = vadd.f32 %v290, %v291
        %v293 = vrot.slane %v292, 2
        %v294 = vadd.f32 %v292, %v293
        %v295 = vrot.slane %v294, 1
        %v296 = vadd.f32 %v294, %v295
        %s297 = vtos %v296
        %v298 = vstv %s297
        %v299 = vadd.f32 %v259, %v298
        %300 = vst.msk [vmem:[#allocation3] sm:$0x1] %vm257, %v299
        %v301 = vld [vmem:[#allocation4] sm:$0x1]
        %v303 = vcombine.high %v213, %v213
        %v305 = vunpack.c.l.s4 1983009808
        %v306 = vunpack.c.0.s8 %v305
        %v307 = vlaneseq
        %v308 = vshrl.u32 %v307, 7
        %v309 = vsub.s32 %v306, %v308
        %v310 = vrot.slane %v213, %v309
        %v312 = vunpack.c.l.s4 1983009808
        %v313 = vunpack.c.0.s8 %v312
        %v314 = vlaneseq
        %v315 = vshrl.u32 %v314, 7
        %v316 = vsub.s32 %v313, %v315
        %v317 = vrot.slane %v303, %v316
        %v318 = vcombine.high %v310, %v310
        %v319 = vcombine.high %v317, %v317
        %v324 = vsel %vm238, %v310, 0.0
        %v325 = vsel %vm238, %v318, 0.0
        %v326 = vadd.f32 %v324, %v325
        %v327 = vsel %vm238, %v317, 0.0
        %v328 = vadd.f32 %v326, %v327
        %v329 = vsel %vm238, %v319, 0.0
        %v330 = vadd.f32 %v328, %v329
        %331 = vadd.xlane.f32.xlu0 %v330
        %v332 = vpop.xlane.xlu0 %331
        %v333 = vrot.slane %v332, 4
        %v334 = vadd.f32 %v332, %v333
        %v335 = vrot.slane %v334, 2
        %v336 = vadd.f32 %v334, %v335
        %v337 = vrot.slane %v336, 1
        %v338 = vadd.f32 %v336, %v337
        %s339 = vtos %v338
        %v340 = vstv %s339
        %v341 = vadd.f32 %v301, %v340
        %342 = vst.msk [vmem:[#allocation4] sm:$0x1] %vm257, %v341
        %p343 = scmp.eq.s32.totalorder %s15, 1
        // Predicated region
        $region41: #{dice_score.3} parent=31 // pred_check
          %p344 = pneg %p343
        $region42: #{dice_score.3} parent=31 // pred_check_branch
          %346 = sbr.rel (%p344) target = $region44
        $region43: #{dice_score.3} parent=31 // pred_region
          %v347 = vld [vmem:[#allocation2] sm:$0x1]
          %v348 = vld [vmem:[#allocation3] sm:$0x1]
          %v349 = vld [vmem:[#allocation4] sm:$0x1]
          %v350 = vsub.f32 %v348, %v347
          %v351 = vsub.f32 %v349, %v347
          %v352 = vsub.f32 2048.0, %v348
          %v353 = vsub.f32 %v352, %v349
          %v354 = vadd.f32 %v353, %v347
          %vm355 = vcmask 57344
          %356 = vst.msk [vmem:[%s3] sm:$0x1] %vm355, 0.0
          %v357 = vadd.f32 %v347, %v351
          %v358 = vrcp.pop %v357
          %v359 = vmul.f32 %v347, %v358
          %360 = vst.msk [vmem:[%s3] sm:$0x1] %vm257, %v359
          %v361 = vadd.f32 %v354, %v350
          %v362 = vrcp.pop %v361
          %v363 = vmul.f32 %v354, %v362
          %v365 = vlaneseq
          %v366 = vshrl.u32 %v365, 7
          %v367 = vsub.s32 0, %v366
          %v368 = vrot.slane %v363, %v367
          %369 = vrot.lane.b32.xlu0 %v368, 1
          %v370 = vpop.permute.xlu0 %369
          %vm372 = vcmask 8200
          %373 = vst.msk [vmem:[%s3] sm:$0x1] %vm372, %v370
          %v374 = vadd.f32 %v354, %v351
          %v375 = vrcp.pop %v374
          %v376 = vmul.f32 %v350, %v375
          %v378 = vlaneseq
          %v379 = vshrl.u32 %v378, 7
          %v380 = vsub.s32 0, %v379
          %v381 = vrot.slane %v376, %v380
          %382 = vrot.lane.b32.xlu0 %v381, 2
          %v383 = vpop.permute.xlu0 %382
          %vm385 = vcmask 16400
          %386 = vst.msk [vmem:[%s3] sm:$0x1] %vm385, %v383
          %v387 = vadd.f32 %v357, %v350
          %v388 = vrcp.pop %v387
          %v389 = vmul.f32 %v347, %v388
          %v391 = vlaneseq
          %v392 = vshrl.u32 %v391, 7
          %v393 = vsub.s32 0, %v392
          %v394 = vrot.slane %v389, %v393
          %395 = vrot.lane.b32.xlu0 %v394, 3
          %v396 = vpop.permute.xlu0 %395
          %vm398 = vcmask 24600
          %399 = vst.msk [vmem:[%s3] sm:$0x1] %vm398, %v396
          %v400 = vmul.f32 %v347, 2.0
          %v401 = vadd.f32 %v400, %v350
          %v402 = vadd.f32 %v401, %v351
          %v403 = vrcp.pop %v402
          %v404 = vmul.f32 %v400, %v403
          %v406 = vlaneseq
          %v407 = vshrl.u32 %v406, 7
          %v408 = vsub.s32 0, %v407
          %v409 = vrot.slane %v404, %v408
          %410 = vrot.lane.b32.xlu0 %v409, 4
          %v411 = vpop.permute.xlu0 %410
          %vm413 = vcmask 32800
          %414 = vst.msk [vmem:[%s3] sm:$0x1] %vm413, %v411
          %v415 = vadd.f32 %v347, %v350
          %v416 = vrcp.pop %v415
          %v417 = vmul.f32 %v347, %v416
          %v419 = vlaneseq
          %v420 = vshrl.u32 %v419, 7
          %v421 = vsub.s32 0, %v420
          %v422 = vrot.slane %v417, %v421
          %423 = vrot.lane.b32.xlu0 %v422, 5
          %v424 = vpop.permute.xlu0 %423
          %vm426 = vcmask 41000
          %427 = vst.msk [vmem:[%s3] sm:$0x1] %vm426, %v424
          %v428 = vmul.f32 %v354, %v375
          %v430 = vlaneseq
          %v431 = vshrl.u32 %v430, 7
          %v432 = vsub.s32 0, %v431
          %v433 = vrot.slane %v428, %v432
          %434 = vrot.lane.b32.xlu0 %v433, 6
          %v435 = vpop.permute.xlu0 %434
          %vm437 = vcmask 49200
          %438 = vst.msk [vmem:[%s3] sm:$0x1] %vm437, %v435
        $region44: #{dice_score.3} parent=31 // pred_fallthru
          _
        // Predicated region
        $region45: #{dice_score.3} parent=31 // pred_check
          %p439 = pneg %p101
        $region46: #{dice_score.3} parent=31 // pred_check_branch
          %441 = sbr.rel (%p439) target = $region48
        $region47: #{dice_score.3} parent=31 // pred_region
          _
        $region48: #{dice_score.3} parent=31 // pred_fallthru
          _
        // Predicated region
        $region49: #{dice_score.3} parent=31 // pred_check
          %p442 = pneg %p101
        $region50: #{dice_score.3} parent=31 // pred_check_branch
          %444 = sbr.rel (%p442) target = $region52
        $region51: #{dice_score.3} parent=31 // pred_region
          _
        $region52: #{dice_score.3} parent=31 // pred_fallthru
          _
      $region32: #{dice_score.3} parent=5 // pred_fallthru
        _
      %p445 = scmp.le.s32.totalorder 2, %s10
      // Predicated region
      $region53: #{dice_score.3} parent=5 // pred_check
        %p446 = pneg %p445
      $region54: #{dice_score.3} parent=5 // pred_check_branch
        %448 = sbr.rel (%p446) target = $region56
      $region55: #{dice_score.3} parent=5 // pred_region
        %s449 = ssub.s32 %s10, 2
      $region56: #{dice_score.3} parent=5 // pred_fallthru
        _
    $region6: #{dice_score.3} parent=1 // loop_footer
      %s14 = sadd.s32 1, %s10
    $region7: #{dice_score.3} parent=1 // loop_footer_branch
      %9 = sbr.rel target = $region3
    $region8: #{dice_score.3} parent=1 // loop_exit
      _
    %450 = vsyncpa [#allocation6], 1
    %s451 = scalar_lea.sflag [#allocation6], 1
    %452 = vsyncpa %s451, 1

</llo_original>
